<compile_context>
chip_gen: v5e
topology: v5e:2x2
jax: 0.10.0
libtpu: 0.0.40
codegen_flags: <defaults>
</compile_context>

<pallas_src>
import functools

import numpy as np
import jax
import jax.numpy as jnp
from jax import lax
from jax.experimental import pallas as pl
from jax.experimental.pallas import tpu as pltpu


# ----------------------------------------------------------------------------
# Exact-GELU helper (erf via Abramowitz & Stegun 7.1.26, |err| <= 1.5e-7).
# Kernel-only (uses pl.reciprocal); matches PyTorch's default erf-based GELU.
# ----------------------------------------------------------------------------
def _erf(x):
    p = np.float32(0.3275911)
    a1 = np.float32(0.254829592)
    a2 = np.float32(-0.284496736)
    a3 = np.float32(1.421413741)
    a4 = np.float32(-1.453152027)
    a5 = np.float32(1.061405429)
    sign = jnp.where(x < 0.0, np.float32(-1.0), np.float32(1.0))
    ax = jnp.abs(x)
    t = pl.reciprocal(np.float32(1.0) + p * ax, approx=True)   # divide -> EUP slot
    poly = t * (a1 + t * (a2 + t * (a3 + t * (a4 + t * a5))))
    return sign * (np.float32(1.0) - poly * jnp.exp(-ax * ax))


def _gelu_exact(x):
    return 0.5 * x * (1.0 + _erf(x * np.float32(1.0 / np.sqrt(2.0))))


# ----------------------------------------------------------------------------
# Fused encoder-layer kernel.  One grid step = b_tile sequences, flattened to
# an (M, D) slab with M = b_tile * seq.
# ----------------------------------------------------------------------------
def _encoder_kernel(x_ref,
                    ln1w_ref, ln1b_ref,
                    wq_ref, bq_ref, wk_ref, bk_ref, wv_ref, bv_ref,
                    wo_ref, bo_ref,
                    ln2w_ref, ln2b_ref,
                    w1_ref, b1_ref, w2_ref, b2_ref,
                    out_ref,
                    cat_ref,
                    *, n_heads, d_head, seq, b_tile, eps, causal_mask):
    f32 = jnp.float32
    mxu_dtype = cat_ref.dtype
    x = x_ref[...].astype(f32)                                   # (M, D)

    def layer_norm(h, w, b):
        mu = jnp.mean(h, axis=-1, keepdims=True)
        var = jnp.mean((h - mu) * (h - mu), axis=-1, keepdims=True)
        return (h - mu) * lax.rsqrt(var + eps) * w + b

    h1 = layer_norm(x, ln1w_ref[...], ln1b_ref[...])             # (M, D)
    h1m = h1.astype(mxu_dtype)

    # Fused, full-width QKV projections (one (M,D)@(D,D) matmul each, f32 acc).
    q = jnp.dot(h1m, wq_ref[...], preferred_element_type=f32) + bq_ref[...]
    k = jnp.dot(h1m, wk_ref[...], preferred_element_type=f32) + bk_ref[...]
    v = jnp.dot(h1m, wv_ref[...], preferred_element_type=f32) + bv_ref[...]

    if causal_mask:
        # Scale q (M x D) once instead of every (S,S) score tile.
        q = q * np.float32(1.0 / np.sqrt(d_head))
        # Additive mask built once and reused for every (batch, head) tile.
        row = lax.broadcasted_iota(jnp.int32, (seq, seq), 0)
        col = lax.broadcasted_iota(jnp.int32, (seq, seq), 1)
        mask_add = jnp.where(col > row, np.float32(-np.inf), np.float32(0.0))
    # else: PyTorch quirk — softmax over the *unscaled, unmasked* scores.

    q = q.astype(mxu_dtype)
    k = k.astype(mxu_dtype)
    v = v.astype(mxu_dtype)

    # Per-(batch, head) attention cores.  Static unroll is fine for small
    # b_tile * n_heads; every intermediate dies into cat_ref so vreg pressure
    # stays low.
    # TODO(synk): move to lax.fori_loop + dynamic slices if b_tile*n_heads grows
    # enough to risk spills.
    for b in range(b_tile):
        r0 = b * seq
        for h in range(n_heads):
            c0 = h * d_head
            qh = q[r0:r0 + seq, c0:c0 + d_head]                  # (S, dh)
            kh = k[r0:r0 + seq, c0:c0 + d_head]
            vh = v[r0:r0 + seq, c0:c0 + d_head]
            # q @ k.T without materializing a transpose.
            scores = lax.dot_general(qh, kh, (((1,), (1,)), ((), ())),
                                     preferred_element_type=f32)  # (S, S)
            if causal_mask:
                scores = scores + mask_add
            m = jnp.max(scores, axis=-1, keepdims=True)
            e = jnp.exp(scores - m)
            probs = e * pl.reciprocal(jnp.sum(e, axis=-1, keepdims=True),
                                      approx=True)
            head_out = jnp.dot(probs.astype(mxu_dtype), vh,
                               preferred_element_type=f32)        # (S, dh)
            # Head-major columns at static offsets -> no in-kernel concatenate.
            cat_ref[r0:r0 + seq, c0:c0 + d_head] = head_out.astype(mxu_dtype)

    # Single full-width W_o matmul over the concatenated heads.
    attn = jnp.dot(cat_ref[...], wo_ref[...], preferred_element_type=f32) + bo_ref[...]

    res1 = x + attn
    # TODO(synk): nn.Dropout treated as identity (eval/inference mode); no RNG.

    h2 = layer_norm(res1, ln2w_ref[...], ln2b_ref[...])
    hid = jnp.dot(h2.astype(mxu_dtype), w1_ref[...],
                  preferred_element_type=f32) + b1_ref[...]
    hid = _gelu_exact(hid)
    mlp = jnp.dot(hid.astype(mxu_dtype), w2_ref[...],
                  preferred_element_type=f32) + b2_ref[...]

    out_ref[...] = (res1 + mlp).astype(out_ref.dtype)


# ----------------------------------------------------------------------------
# BlockSpec helpers
# ----------------------------------------------------------------------------
def _const_index_map(ndim):
    return lambda i: (0,) * ndim


def _resident_spec(shape):
    """Weight block resident in VMEM across the whole grid (constant index_map).

    Constant index_map needs no double buffering; request single buffering to
    halve resident-weight VMEM (matters on v7x's 64 MiB).  Falls back silently
    on jax versions without BlockSpec.pipeline_mode.
    """
    idx = _const_index_map(len(shape))
    if hasattr(pl, "Buffered"):
        try:
            return pl.BlockSpec(shape, idx, pipeline_mode=pl.Buffered(1))
        except Exception:
            pass
    return pl.BlockSpec(shape, idx)


# ----------------------------------------------------------------------------
# Wrapper
# ----------------------------------------------------------------------------
def transformer_encoder(x, p, *, n_heads, d_head, eps=1e-5, causal_mask=True,
                        b_tile=None, mxu_dtype=jnp.bfloat16):
    """x: (B, S, D).  Weights in `p` are fused, head-major (see __main__)."""
    B, S, D = x.shape
    H, dh = n_heads, d_head
    assert H * dh == D, "n_heads * d_head must equal d_model"
    d_ff = p["w1"].shape[-1]

    if b_tile is None:
        # Merge batch into the matmul M dimension: aim for >=256 rows per step,
        # but never more than B, and it must divide B.  (On v7x you may prefer
        # b_tile = B//2 to keep >=2 parallel steps for the 2 TensorCores.)
        b_tile = min(B, max(1, 256 // S))
        while B % b_tile:
            b_tile -= 1
    assert B % b_tile == 0
    M = b_tile * S
    assert M % 8 == 0 and D % 128 == 0, "tile must respect the (8,128) layout"

    # bf16 MXU inputs for the weights; biases / LN params stay f32 (applied
    # after f32 accumulation).
    wq = p["wq"].astype(mxu_dtype)
    wk = p["wk"].astype(mxu_dtype)
    wv = p["wv"].astype(mxu_dtype)
    wo = p["wo"].astype(mxu_dtype)
    w1 = p["w1"].astype(mxu_dtype)
    w2 = p["w2"].astype(mxu_dtype)

    # Wrapper-side layout plumbing: lane-dense (B*S, D) slab in/out.
    x2 = x.reshape(B * S, D)

    kernel = functools.partial(_encoder_kernel, n_heads=H, d_head=dh, seq=S,
                               b_tile=b_tile, eps=float(eps),
                               causal_mask=bool(causal_mask))

    in_specs = [
        pl.BlockSpec((M, D), lambda i: (i, 0)),        # embeddings slab
        _resident_spec((1, D)), _resident_spec((1, D)),          # ln1 w, b
        _resident_spec((D, D)), _resident_spec((1, D)),          # W_q, b_q (fused heads)
        _resident_spec((D, D)), _resident_spec((1, D)),          # W_k, b_k
        _resident_spec((D, D)), _resident_spec((1, D)),          # W_v, b_v
        _resident_spec((D, D)), _resident_spec((1, D)),          # W_o, b_o
        _resident_spec((1, D)), _resident_spec((1, D)),          # ln2 w, b
        _resident_spec((D, d_ff)), _resident_spec((1, d_ff)),    # mlp W1, b1
        _resident_spec((d_ff, D)), _resident_spec((1, D)),       # mlp W2, b2
    ]

    # Explicit VMEM budget: resident weights (+fallback double-buffer margin),
    # double-buffered activation slabs, concat scratch, and working set.
    w_item = jnp.dtype(mxu_dtype).itemsize
    weight_bytes = (4 * D * D + 2 * D * d_ff) * w_item + (8 * D + d_ff) * 4
    act_bytes = 2 * 2 * M * D * 4                     # in + out slabs, x2 buffers
    scratch_bytes = M * D * w_item
    work_bytes = M * (6 * D + 2 * d_ff) * 4           # rough f32 working set
    est = int(1.25 * (2 * weight_bytes + act_bytes + scratch_bytes + work_bytes)) + (4 << 20)
    vmem_limit = min(max(est, 32 << 20), 100 << 20)

    out2 = pl.pallas_call(
        kernel,
        out_shape=jax.ShapeDtypeStruct((B * S, D), x.dtype),
        grid_spec=pltpu.PrefetchScalarGridSpec(
            num_scalar_prefetch=0,
            grid=(B // b_tile,),
            in_specs=in_specs,
            out_specs=pl.BlockSpec((M, D), lambda i: (i, 0)),
            scratch_shapes=[pltpu.VMEM((M, D), mxu_dtype)],      # head-concat buffer
        ),
        compiler_params=pltpu.CompilerParams(
            dimension_semantics=("parallel",),   # batch tiles shard across v7x's 2 TCs
            vmem_limit_bytes=vmem_limit,
        ),
    )(x2,
      p["ln1_w"], p["ln1_b"],
      wq, p["bq"], wk, p["bk"], wv, p["bv"],
      wo, p["bo"],
      p["ln2_w"], p["ln2_b"],
      w1, p["b1"], w2, p["b2"])

    return out2.reshape(B, S, D)


# ----------------------------------------------------------------------------
# Pure-JAX reference (mirrors the PyTorch forward, f32 "highest" precision)
# ----------------------------------------------------------------------------
def transformer_encoder_ref(x, p, *, n_heads, d_head, eps=1e-5, causal_mask=True):
    with jax.default_matmul_precision("highest"):
        def ln(h, w, b):
            mu = h.mean(-1, keepdims=True)
            var = ((h - mu) ** 2).mean(-1, keepdims=True)
            return (h - mu) / jnp.sqrt(var + eps) * w + b

        B, S, D = x.shape
        H, dh = n_heads, d_head
        h1 = ln(x, p["ln1_w"], p["ln1_b"])
        q = (h1 @ p["wq"] + p["bq"]).reshape(B, S, H, dh)
        k = (h1 @ p["wk"] + p["bk"]).reshape(B, S, H, dh)
        v = (h1 @ p["wv"] + p["bv"]).reshape(B, S, H, dh)
        s = jnp.einsum("bqhd,bkhd->bhqk", q, k)
        if causal_mask:
            s = s / np.sqrt(dh)
            tri = jnp.triu(jnp.ones((S, S), dtype=bool), 1)
            s = jnp.where(tri, -jnp.inf, s)
        # else: softmax over unscaled, unmasked scores (module's cfg.mask=False path)
        probs = jax.nn.softmax(s, axis=-1)
        cat = jnp.einsum("bhqk,bkhd->bqhd", probs, v).reshape(B, S, D)
        attn = cat @ p["wo"] + p["bo"]

        res1 = x + attn                                      # dropout = identity (eval)
        h2 = ln(res1, p["ln2_w"], p["ln2_b"])
        hid = h2 @ p["w1"] + p["b1"]
        hid = 0.5 * hid * (1.0 + lax.erf(hid / np.sqrt(2.0)))  # exact GELU
        return res1 + hid @ p["w2"] + p["b2"]


if __name__ == "__main__":
    # Small ViT-ish config. d_model is a multiple of 128 so slabs are lane-dense.
    B, S = 2, 8
    D, H, r_mlp = 128, 4, 4
    dh = D // H
    d_ff = D * r_mlp
    eps = 1e-5
    causal_mask = True   # cfg.mask = True

    key = jax.random.PRNGKey(0)
    keys = jax.random.split(key, 17)
    f32 = jnp.float32

    def nrm(k, shape, scale):
        return (scale * jax.random.normal(k, shape)).astype(f32)

    # Fused, head-major weight layout: columns [h*dh:(h+1)*dh] of wq/wk/wv belong
    # to head h, and rows of wo correspondingly (== concat of per-head Linears).
    params = dict(
        ln1_w=(1.0 + nrm(keys[0], (1, D), 0.1)),
        ln1_b=nrm(keys[1], (1, D), 0.1),
        wq=nrm(keys[2], (D, D), D ** -0.5),
        bq=nrm(keys[3], (1, D), 0.02),
        wk=nrm(keys[4], (D, D), D ** -0.5),
        bk=nrm(keys[5], (1, D), 0.02),
        wv=nrm(keys[6], (D, D), D ** -0.5),
        bv=nrm(keys[7], (1, D), 0.02),
        wo=nrm(keys[8], (D, D), D ** -0.5),
        bo=nrm(keys[9], (1, D), 0.02),
        ln2_w=(1.0 + nrm(keys[10], (1, D), 0.1)),
        ln2_b=nrm(keys[11], (1, D), 0.1),
        w1=nrm(keys[12], (D, d_ff), D ** -0.5),
        b1=nrm(keys[13], (1, d_ff), 0.02),
        w2=nrm(keys[14], (d_ff, D), d_ff ** -0.5),
        b2=nrm(keys[15], (1, D), 0.02),
    )
    embeddings = jax.random.normal(keys[16], (B, S, D), dtype=f32)

    out = transformer_encoder(embeddings, params, n_heads=H, d_head=dh,
                              eps=eps, causal_mask=causal_mask)
    out = jax.block_until_ready(out)

    ref = transformer_encoder_ref(embeddings, params, n_heads=H, d_head=dh,
                                  eps=eps, causal_mask=causal_mask)
    # Kernel uses bf16 MXU inputs (f32 accumulation) + approx reciprocals, so a
    # slightly looser tolerance than a pure-f32 comparison is expected.
    np.testing.assert_allclose(np.asarray(out), np.asarray(ref),
                               rtol=2e-2, atol=2.5e-2)

    print("KERNEL_OK")
</pallas_src>

<mosaic_0001>
module attributes {stable_mosaic.version = 11 : i64} {
  func.func @_encoder_kernel(%arg0: i32, %arg1: memref<16x128xf32, #tpu.memory_space<vmem>>, %arg2: memref<1x128xf32, #tpu.memory_space<vmem>>, %arg3: memref<1x128xf32, #tpu.memory_space<vmem>>, %arg4: memref<128x128xbf16, #tpu.memory_space<vmem>>, %arg5: memref<1x128xf32, #tpu.memory_space<vmem>>, %arg6: memref<128x128xbf16, #tpu.memory_space<vmem>>, %arg7: memref<1x128xf32, #tpu.memory_space<vmem>>, %arg8: memref<128x128xbf16, #tpu.memory_space<vmem>>, %arg9: memref<1x128xf32, #tpu.memory_space<vmem>>, %arg10: memref<128x128xbf16, #tpu.memory_space<vmem>>, %arg11: memref<1x128xf32, #tpu.memory_space<vmem>>, %arg12: memref<1x128xf32, #tpu.memory_space<vmem>>, %arg13: memref<1x128xf32, #tpu.memory_space<vmem>>, %arg14: memref<128x512xbf16, #tpu.memory_space<vmem>>, %arg15: memref<1x512xf32, #tpu.memory_space<vmem>>, %arg16: memref<512x128xbf16, #tpu.memory_space<vmem>>, %arg17: memref<1x128xf32, #tpu.memory_space<vmem>>, %arg18: memref<16x128xf32, #tpu.memory_space<vmem>>, %arg19: memref<16x128xbf16, #tpu.memory_space<vmem>>) attributes {dimension_semantics = [#tpu.dimension_semantics<parallel>], iteration_bounds = array<i64: 1>, scalar_prefetch = 0 : i64, scratch_operands = 1 : i64, tpu.core_type = #tpu.core_type<tc>, window_params = [{transform_indices = @transform_0, window_bounds = array<i64: 16, 128>}, {pipeline_mode = #tpu.pipeline_mode<synchronous>, transform_indices = @transform_1, window_bounds = array<i64: 1, 128>}, {pipeline_mode = #tpu.pipeline_mode<synchronous>, transform_indices = @transform_2, window_bounds = array<i64: 1, 128>}, {pipeline_mode = #tpu.pipeline_mode<synchronous>, transform_indices = @transform_3, window_bounds = array<i64: 128, 128>}, {pipeline_mode = #tpu.pipeline_mode<synchronous>, transform_indices = @transform_4, window_bounds = array<i64: 1, 128>}, {pipeline_mode = #tpu.pipeline_mode<synchronous>, transform_indices = @transform_5, window_bounds = array<i64: 128, 128>}, {pipeline_mode = #tpu.pipeline_mode<synchronous>, transform_indices = @transform_6, window_bounds = array<i64: 1, 128>}, {pipeline_mode = #tpu.pipeline_mode<synchronous>, transform_indices = @transform_7, window_bounds = array<i64: 128, 128>}, {pipeline_mode = #tpu.pipeline_mode<synchronous>, transform_indices = @transform_8, window_bounds = array<i64: 1, 128>}, {pipeline_mode = #tpu.pipeline_mode<synchronous>, transform_indices = @transform_9, window_bounds = array<i64: 128, 128>}, {pipeline_mode = #tpu.pipeline_mode<synchronous>, transform_indices = @transform_10, window_bounds = array<i64: 1, 128>}, {pipeline_mode = #tpu.pipeline_mode<synchronous>, transform_indices = @transform_11, window_bounds = array<i64: 1, 128>}, {pipeline_mode = #tpu.pipeline_mode<synchronous>, transform_indices = @transform_12, window_bounds = array<i64: 1, 128>}, {pipeline_mode = #tpu.pipeline_mode<synchronous>, transform_indices = @transform_13, window_bounds = array<i64: 128, 512>}, {pipeline_mode = #tpu.pipeline_mode<synchronous>, transform_indices = @transform_14, window_bounds = array<i64: 1, 512>}, {pipeline_mode = #tpu.pipeline_mode<synchronous>, transform_indices = @transform_15, window_bounds = array<i64: 512, 128>}, {pipeline_mode = #tpu.pipeline_mode<synchronous>, transform_indices = @transform_16, window_bounds = array<i64: 1, 128>}, {transform_indices = @transform_17, window_bounds = array<i64: 16, 128>}]} {
    %c0 = arith.constant 0 : index
    %c0_0 = arith.constant 0 : index
    %0 = vector.load %arg1[%c0, %c0_0] : memref<16x128xf32, #tpu.memory_space<vmem>>, vector<16x128xf32>
    %c0_1 = arith.constant 0 : index
    %c0_2 = arith.constant 0 : index
    %1 = vector.load %arg2[%c0_1, %c0_2] : memref<1x128xf32, #tpu.memory_space<vmem>>, vector<1x128xf32>
    %c0_3 = arith.constant 0 : index
    %c0_4 = arith.constant 0 : index
    %2 = vector.load %arg3[%c0_3, %c0_4] : memref<1x128xf32, #tpu.memory_space<vmem>>, vector<1x128xf32>
    %cst = arith.constant dense<0.000000e+00> : vector<16xf32>
    %3 = vector.multi_reduction <add>, %0, %cst [1] : vector<16x128xf32> to vector<16xf32>
    %4 = vector.shape_cast %3 : vector<16xf32> to vector<16x1xf32>
    %cst_5 = arith.constant 1.280000e+02 : f32
    %5 = vector.broadcast %cst_5 : f32 to vector<16x1xf32>
    %6 = arith.divf %4, %5 : vector<16x1xf32>
    %7 = vector.broadcast %6 : vector<16x1xf32> to vector<16x128xf32>
    %8 = arith.subf %0, %7 : vector<16x128xf32>
    %9 = vector.broadcast %6 : vector<16x1xf32> to vector<16x128xf32>
    %10 = arith.subf %0, %9 : vector<16x128xf32>
    %11 = arith.mulf %8, %10 : vector<16x128xf32>
    %cst_6 = arith.constant dense<0.000000e+00> : vector<16xf32>
    %12 = vector.multi_reduction <add>, %11, %cst_6 [1] : vector<16x128xf32> to vector<16xf32>
    %13 = vector.shape_cast %12 : vector<16xf32> to vector<16x1xf32>
    %cst_7 = arith.constant 1.280000e+02 : f32
    %14 = vector.broadcast %cst_7 : f32 to vector<16x1xf32>
    %15 = arith.divf %13, %14 : vector<16x1xf32>
    %16 = vector.broadcast %6 : vector<16x1xf32> to vector<16x128xf32>
    %17 = arith.subf %0, %16 : vector<16x128xf32>
    %cst_8 = arith.constant 9.99999974E-6 : f32
    %18 = vector.broadcast %cst_8 : f32 to vector<16x1xf32>
    %19 = arith.addf %15, %18 : vector<16x1xf32>
    %20 = math.rsqrt %19 : vector<16x1xf32>
    %21 = vector.broadcast %20 : vector<16x1xf32> to vector<16x128xf32>
    %22 = arith.mulf %17, %21 : vector<16x128xf32>
    %23 = vector.broadcast %1 : vector<1x128xf32> to vector<16x128xf32>
    %24 = arith.mulf %22, %23 : vector<16x128xf32>
    %25 = vector.broadcast %2 : vector<1x128xf32> to vector<16x128xf32>
    %26 = arith.addf %24, %25 : vector<16x128xf32>
    %27 = arith.truncf %26 : vector<16x128xf32> to vector<16x128xbf16>
    %c0_9 = arith.constant 0 : index
    %c0_10 = arith.constant 0 : index
    %28 = vector.load %arg4[%c0_9, %c0_10] : memref<128x128xbf16, #tpu.memory_space<vmem>>, vector<128x128xbf16>
    %cst_11 = arith.constant dense<0.000000e+00> : vector<16x128xf32>
    %29 = tpu.matmul %27, %28, %cst_11 {dimension_numbers = #tpu.dot_dimension_numbers<[1], [0], [0], [1], [0, 0, 1, 1], [], []>} : vector<16x128xbf16>, vector<128x128xbf16>, vector<16x128xf32> -> vector<16x128xf32>
    %c0_12 = arith.constant 0 : index
    %c0_13 = arith.constant 0 : index
    %30 = vector.load %arg5[%c0_12, %c0_13] : memref<1x128xf32, #tpu.memory_space<vmem>>, vector<1x128xf32>
    %31 = vector.broadcast %30 : vector<1x128xf32> to vector<16x128xf32>
    %32 = arith.addf %29, %31 : vector<16x128xf32>
    %c0_14 = arith.constant 0 : index
    %c0_15 = arith.constant 0 : index
    %33 = vector.load %arg6[%c0_14, %c0_15] : memref<128x128xbf16, #tpu.memory_space<vmem>>, vector<128x128xbf16>
    %cst_16 = arith.constant dense<0.000000e+00> : vector<16x128xf32>
    %34 = tpu.matmul %27, %33, %cst_16 {dimension_numbers = #tpu.dot_dimension_numbers<[1], [0], [0], [1], [0, 0, 1, 1], [], []>} : vector<16x128xbf16>, vector<128x128xbf16>, vector<16x128xf32> -> vector<16x128xf32>
    %c0_17 = arith.constant 0 : index
    %c0_18 = arith.constant 0 : index
    %35 = vector.load %arg7[%c0_17, %c0_18] : memref<1x128xf32, #tpu.memory_space<vmem>>, vector<1x128xf32>
    %36 = vector.broadcast %35 : vector<1x128xf32> to vector<16x128xf32>
    %37 = arith.addf %34, %36 : vector<16x128xf32>
    %c0_19 = arith.constant 0 : index
    %c0_20 = arith.constant 0 : index
    %38 = vector.load %arg8[%c0_19, %c0_20] : memref<128x128xbf16, #tpu.memory_space<vmem>>, vector<128x128xbf16>
    %cst_21 = arith.constant dense<0.000000e+00> : vector<16x128xf32>
    %39 = tpu.matmul %27, %38, %cst_21 {dimension_numbers = #tpu.dot_dimension_numbers<[1], [0], [0], [1], [0, 0, 1, 1], [], []>} : vector<16x128xbf16>, vector<128x128xbf16>, vector<16x128xf32> -> vector<16x128xf32>
    %c0_22 = arith.constant 0 : index
    %c0_23 = arith.constant 0 : index
    %40 = vector.load %arg9[%c0_22, %c0_23] : memref<1x128xf32, #tpu.memory_space<vmem>>, vector<1x128xf32>
    %41 = vector.broadcast %40 : vector<1x128xf32> to vector<16x128xf32>
    %42 = arith.addf %39, %41 : vector<16x128xf32>
    %cst_24 = arith.constant 0.176776692 : f32
    %43 = vector.broadcast %cst_24 : f32 to vector<16x128xf32>
    %44 = arith.mulf %32, %43 : vector<16x128xf32>
    %45 = tpu.iota {dimensions = array<i32: 0>} : vector<8x8xi32>
    %46 = tpu.iota {dimensions = array<i32: 1>} : vector<8x8xi32>
    %47 = arith.cmpi sgt, %46, %45 : vector<8x8xi32>
    %cst_25 = arith.constant 0xFF800000 : f32
    %cst_26 = arith.constant 0.000000e+00 : f32
    %48 = vector.broadcast %cst_25 : f32 to vector<8x8xf32>
    %49 = vector.broadcast %cst_26 : f32 to vector<8x8xf32>
    %50 = arith.select %47, %48, %49 : vector<8x8xi1>, vector<8x8xf32>
    %51 = arith.truncf %44 : vector<16x128xf32> to vector<16x128xbf16>
    %52 = arith.truncf %37 : vector<16x128xf32> to vector<16x128xbf16>
    %53 = arith.truncf %42 : vector<16x128xf32> to vector<16x128xbf16>
    %54 = vector.extract_strided_slice %51 {offsets = [0, 0], sizes = [8, 32], strides = [1, 1]} : vector<16x128xbf16> to vector<8x32xbf16>
    %55 = vector.extract_strided_slice %52 {offsets = [0, 0], sizes = [8, 32], strides = [1, 1]} : vector<16x128xbf16> to vector<8x32xbf16>
    %56 = vector.extract_strided_slice %53 {offsets = [0, 0], sizes = [8, 32], strides = [1, 1]} : vector<16x128xbf16> to vector<8x32xbf16>
    %cst_27 = arith.constant dense<0.000000e+00> : vector<8x8xf32>
    %57 = tpu.matmul %54, %55, %cst_27 {dimension_numbers = #tpu.dot_dimension_numbers<[1], [1], [0], [0], [0, 0, 1, 0], [], []>} : vector<8x32xbf16>, vector<8x32xbf16>, vector<8x8xf32> -> vector<8x8xf32>
    %58 = arith.addf %57, %50 : vector<8x8xf32>
    %cst_28 = arith.constant dense<0xFF800000> : vector<8xf32>
    %59 = vector.multi_reduction <maximumf>, %58, %cst_28 [1] : vector<8x8xf32> to vector<8xf32>
    %60 = vector.shape_cast %59 : vector<8xf32> to vector<8x1xf32>
    %61 = vector.broadcast %60 : vector<8x1xf32> to vector<8x8xf32>
    %62 = arith.subf %58, %61 : vector<8x8xf32>
    %63 = math.exp %62 : vector<8x8xf32>
    %cst_29 = arith.constant dense<0.000000e+00> : vector<8xf32>
    %64 = vector.multi_reduction <add>, %63, %cst_29 [1] : vector<8x8xf32> to vector<8xf32>
    %65 = vector.shape_cast %64 : vector<8xf32> to vector<8x1xf32>
    %66 = tpu.reciprocal %65 {approx = true} : vector<8x1xf32> -> vector<8x1xf32>
    %67 = vector.broadcast %66 : vector<8x1xf32> to vector<8x8xf32>
    %68 = arith.mulf %63, %67 : vector<8x8xf32>
    %69 = arith.truncf %68 : vector<8x8xf32> to vector<8x8xbf16>
    %cst_30 = arith.constant dense<0.000000e+00> : vector<8x32xf32>
    %70 = tpu.matmul %69, %56, %cst_30 {dimension_numbers = #tpu.dot_dimension_numbers<[1], [0], [0], [1], [0, 0, 1, 1], [], []>} : vector<8x8xbf16>, vector<8x32xbf16>, vector<8x32xf32> -> vector<8x32xf32>
    %71 = arith.truncf %70 : vector<8x32xf32> to vector<8x32xbf16>
    %c0_31 = arith.constant 0 : index
    %c0_32 = arith.constant 0 : index
    %72 = vector.load %arg19[%c0_31, %c0_32] : memref<16x128xbf16, #tpu.memory_space<vmem>>, vector<8x32xbf16>
    tpu.vector_store %arg19[%c0_31, %c0_32], %71 {strides = array<i32>} : memref<16x128xbf16, #tpu.memory_space<vmem>>, vector<8x32xbf16>,
    %73 = vector.extract_strided_slice %51 {offsets = [0, 32], sizes = [8, 32], strides = [1, 1]} : vector<16x128xbf16> to vector<8x32xbf16>
    %74 = vector.extract_strided_slice %52 {offsets = [0, 32], sizes = [8, 32], strides = [1, 1]} : vector<16x128xbf16> to vector<8x32xbf16>
    %75 = vector.extract_strided_slice %53 {offsets = [0, 32], sizes = [8, 32], strides = [1, 1]} : vector<16x128xbf16> to vector<8x32xbf16>
    %cst_33 = arith.constant dense<0.000000e+00> : vector<8x8xf32>
    %76 = tpu.matmul %73, %74, %cst_33 {dimension_numbers = #tpu.dot_dimension_numbers<[1], [1], [0], [0], [0, 0, 1, 0], [], []>} : vector<8x32xbf16>, vector<8x32xbf16>, vector<8x8xf32> -> vector<8x8xf32>
    %77 = arith.addf %76, %50 : vector<8x8xf32>
    %cst_34 = arith.constant dense<0xFF800000> : vector<8xf32>
    %78 = vector.multi_reduction <maximumf>, %77, %cst_34 [1] : vector<8x8xf32> to vector<8xf32>
    %79 = vector.shape_cast %78 : vector<8xf32> to vector<8x1xf32>
    %80 = vector.broadcast %79 : vector<8x1xf32> to vector<8x8xf32>
    %81 = arith.subf %77, %80 : vector<8x8xf32>
    %82 = math.exp %81 : vector<8x8xf32>
    %cst_35 = arith.constant dense<0.000000e+00> : vector<8xf32>
    %83 = vector.multi_reduction <add>, %82, %cst_35 [1] : vector<8x8xf32> to vector<8xf32>
    %84 = vector.shape_cast %83 : vector<8xf32> to vector<8x1xf32>
    %85 = tpu.reciprocal %84 {approx = true} : vector<8x1xf32> -> vector<8x1xf32>
    %86 = vector.broadcast %85 : vector<8x1xf32> to vector<8x8xf32>
    %87 = arith.mulf %82, %86 : vector<8x8xf32>
    %88 = arith.truncf %87 : vector<8x8xf32> to vector<8x8xbf16>
    %cst_36 = arith.constant dense<0.000000e+00> : vector<8x32xf32>
    %89 = tpu.matmul %88, %75, %cst_36 {dimension_numbers = #tpu.dot_dimension_numbers<[1], [0], [0], [1], [0, 0, 1, 1], [], []>} : vector<8x8xbf16>, vector<8x32xbf16>, vector<8x32xf32> -> vector<8x32xf32>
    %90 = arith.truncf %89 : vector<8x32xf32> to vector<8x32xbf16>
    %c0_37 = arith.constant 0 : index
    %c32 = arith.constant 32 : index
    %91 = vector.load %arg19[%c0_37, %c32] : memref<16x128xbf16, #tpu.memory_space<vmem>>, vector<8x32xbf16>
    tpu.vector_store %arg19[%c0_37, %c32], %90 {strides = array<i32>} : memref<16x128xbf16, #tpu.memory_space<vmem>>, vector<8x32xbf16>,
    %92 = vector.extract_strided_slice %51 {offsets = [0, 64], sizes = [8, 32], strides = [1, 1]} : vector<16x128xbf16> to vector<8x32xbf16>
    %93 = vector.extract_strided_slice %52 {offsets = [0, 64], sizes = [8, 32], strides = [1, 1]} : vector<16x128xbf16> to vector<8x32xbf16>
    %94 = vector.extract_strided_slice %53 {offsets = [0, 64], sizes = [8, 32], strides = [1, 1]} : vector<16x128xbf16> to vector<8x32xbf16>
    %cst_38 = arith.constant dense<0.000000e+00> : vector<8x8xf32>
    %95 = tpu.matmul %92, %93, %cst_38 {dimension_numbers = #tpu.dot_dimension_numbers<[1], [1], [0], [0], [0, 0, 1, 0], [], []>} : vector<8x32xbf16>, vector<8x32xbf16>, vector<8x8xf32> -> vector<8x8xf32>
    %96 = arith.addf %95, %50 : vector<8x8xf32>
    %cst_39 = arith.constant dense<0xFF800000> : vector<8xf32>
    %97 = vector.multi_reduction <maximumf>, %96, %cst_39 [1] : vector<8x8xf32> to vector<8xf32>
    %98 = vector.shape_cast %97 : vector<8xf32> to vector<8x1xf32>
    %99 = vector.broadcast %98 : vector<8x1xf32> to vector<8x8xf32>
    %100 = arith.subf %96, %99 : vector<8x8xf32>
    %101 = math.exp %100 : vector<8x8xf32>
    %cst_40 = arith.constant dense<0.000000e+00> : vector<8xf32>
    %102 = vector.multi_reduction <add>, %101, %cst_40 [1] : vector<8x8xf32> to vector<8xf32>
    %103 = vector.shape_cast %102 : vector<8xf32> to vector<8x1xf32>
    %104 = tpu.reciprocal %103 {approx = true} : vector<8x1xf32> -> vector<8x1xf32>
    %105 = vector.broadcast %104 : vector<8x1xf32> to vector<8x8xf32>
    %106 = arith.mulf %101, %105 : vector<8x8xf32>
    %107 = arith.truncf %106 : vector<8x8xf32> to vector<8x8xbf16>
    %cst_41 = arith.constant dense<0.000000e+00> : vector<8x32xf32>
    %108 = tpu.matmul %107, %94, %cst_41 {dimension_numbers = #tpu.dot_dimension_numbers<[1], [0], [0], [1], [0, 0, 1, 1], [], []>} : vector<8x8xbf16>, vector<8x32xbf16>, vector<8x32xf32> -> vector<8x32xf32>
    %109 = arith.truncf %108 : vector<8x32xf32> to vector<8x32xbf16>
    %c0_42 = arith.constant 0 : index
    %c64 = arith.constant 64 : index
    %110 = vector.load %arg19[%c0_42, %c64] : memref<16x128xbf16, #tpu.memory_space<vmem>>, vector<8x32xbf16>
    tpu.vector_store %arg19[%c0_42, %c64], %109 {strides = array<i32>} : memref<16x128xbf16, #tpu.memory_space<vmem>>, vector<8x32xbf16>,
    %111 = vector.extract_strided_slice %51 {offsets = [0, 96], sizes = [8, 32], strides = [1, 1]} : vector<16x128xbf16> to vector<8x32xbf16>
    %112 = vector.extract_strided_slice %52 {offsets = [0, 96], sizes = [8, 32], strides = [1, 1]} : vector<16x128xbf16> to vector<8x32xbf16>
    %113 = vector.extract_strided_slice %53 {offsets = [0, 96], sizes = [8, 32], strides = [1, 1]} : vector<16x128xbf16> to vector<8x32xbf16>
    %cst_43 = arith.constant dense<0.000000e+00> : vector<8x8xf32>
    %114 = tpu.matmul %111, %112, %cst_43 {dimension_numbers = #tpu.dot_dimension_numbers<[1], [1], [0], [0], [0, 0, 1, 0], [], []>} : vector<8x32xbf16>, vector<8x32xbf16>, vector<8x8xf32> -> vector<8x8xf32>
    %115 = arith.addf %114, %50 : vector<8x8xf32>
    %cst_44 = arith.constant dense<0xFF800000> : vector<8xf32>
    %116 = vector.multi_reduction <maximumf>, %115, %cst_44 [1] : vector<8x8xf32> to vector<8xf32>
    %117 = vector.shape_cast %116 : vector<8xf32> to vector<8x1xf32>
    %118 = vector.broadcast %117 : vector<8x1xf32> to vector<8x8xf32>
    %119 = arith.subf %115, %118 : vector<8x8xf32>
    %120 = math.exp %119 : vector<8x8xf32>
    %cst_45 = arith.constant dense<0.000000e+00> : vector<8xf32>
    %121 = vector.multi_reduction <add>, %120, %cst_45 [1] : vector<8x8xf32> to vector<8xf32>
    %122 = vector.shape_cast %121 : vector<8xf32> to vector<8x1xf32>
    %123 = tpu.reciprocal %122 {approx = true} : vector<8x1xf32> -> vector<8x1xf32>
    %124 = vector.broadcast %123 : vector<8x1xf32> to vector<8x8xf32>
    %125 = arith.mulf %120, %124 : vector<8x8xf32>
    %126 = arith.truncf %125 : vector<8x8xf32> to vector<8x8xbf16>
    %cst_46 = arith.constant dense<0.000000e+00> : vector<8x32xf32>
    %127 = tpu.matmul %126, %113, %cst_46 {dimension_numbers = #tpu.dot_dimension_numbers<[1], [0], [0], [1], [0, 0, 1, 1], [], []>} : vector<8x8xbf16>, vector<8x32xbf16>, vector<8x32xf32> -> vector<8x32xf32>
    %128 = arith.truncf %127 : vector<8x32xf32> to vector<8x32xbf16>
    %c0_47 = arith.constant 0 : index
    %c96 = arith.constant 96 : index
    %129 = vector.load %arg19[%c0_47, %c96] : memref<16x128xbf16, #tpu.memory_space<vmem>>, vector<8x32xbf16>
    tpu.vector_store %arg19[%c0_47, %c96], %128 {strides = array<i32>} : memref<16x128xbf16, #tpu.memory_space<vmem>>, vector<8x32xbf16>,
    %130 = vector.extract_strided_slice %51 {offsets = [8, 0], sizes = [8, 32], strides = [1, 1]} : vector<16x128xbf16> to vector<8x32xbf16>
    %131 = vector.extract_strided_slice %52 {offsets = [8, 0], sizes = [8, 32], strides = [1, 1]} : vector<16x128xbf16> to vector<8x32xbf16>
    %132 = vector.extract_strided_slice %53 {offsets = [8, 0], sizes = [8, 32], strides = [1, 1]} : vector<16x128xbf16> to vector<8x32xbf16>
    %cst_48 = arith.constant dense<0.000000e+00> : vector<8x8xf32>
    %133 = tpu.matmul %130, %131, %cst_48 {dimension_numbers = #tpu.dot_dimension_numbers<[1], [1], [0], [0], [0, 0, 1, 0], [], []>} : vector<8x32xbf16>, vector<8x32xbf16>, vector<8x8xf32> -> vector<8x8xf32>
    %134 = arith.addf %133, %50 : vector<8x8xf32>
    %cst_49 = arith.constant dense<0xFF800000> : vector<8xf32>
    %135 = vector.multi_reduction <maximumf>, %134, %cst_49 [1] : vector<8x8xf32> to vector<8xf32>
    %136 = vector.shape_cast %135 : vector<8xf32> to vector<8x1xf32>
    %137 = vector.broadcast %136 : vector<8x1xf32> to vector<8x8xf32>
    %138 = arith.subf %134, %137 : vector<8x8xf32>
    %139 = math.exp %138 : vector<8x8xf32>
    %cst_50 = arith.constant dense<0.000000e+00> : vector<8xf32>
    %140 = vector.multi_reduction <add>, %139, %cst_50 [1] : vector<8x8xf32> to vector<8xf32>
    %141 = vector.shape_cast %140 : vector<8xf32> to vector<8x1xf32>
    %142 = tpu.reciprocal %141 {approx = true} : vector<8x1xf32> -> vector<8x1xf32>
    %143 = vector.broadcast %142 : vector<8x1xf32> to vector<8x8xf32>
    %144 = arith.mulf %139, %143 : vector<8x8xf32>
    %145 = arith.truncf %144 : vector<8x8xf32> to vector<8x8xbf16>
    %cst_51 = arith.constant dense<0.000000e+00> : vector<8x32xf32>
    %146 = tpu.matmul %145, %132, %cst_51 {dimension_numbers = #tpu.dot_dimension_numbers<[1], [0], [0], [1], [0, 0, 1, 1], [], []>} : vector<8x8xbf16>, vector<8x32xbf16>, vector<8x32xf32> -> vector<8x32xf32>
    %147 = arith.truncf %146 : vector<8x32xf32> to vector<8x32xbf16>
    %c8 = arith.constant 8 : index
    %c0_52 = arith.constant 0 : index
    %148 = vector.load %arg19[%c8, %c0_52] : memref<16x128xbf16, #tpu.memory_space<vmem>>, vector<8x32xbf16>
    tpu.vector_store %arg19[%c8, %c0_52], %147 {strides = array<i32>} : memref<16x128xbf16, #tpu.memory_space<vmem>>, vector<8x32xbf16>,
    %149 = vector.extract_strided_slice %51 {offsets = [8, 32], sizes = [8, 32], strides = [1, 1]} : vector<16x128xbf16> to vector<8x32xbf16>
    %150 = vector.extract_strided_slice %52 {offsets = [8, 32], sizes = [8, 32], strides = [1, 1]} : vector<16x128xbf16> to vector<8x32xbf16>
    %151 = vector.extract_strided_slice %53 {offsets = [8, 32], sizes = [8, 32], strides = [1, 1]} : vector<16x128xbf16> to vector<8x32xbf16>
    %cst_53 = arith.constant dense<0.000000e+00> : vector<8x8xf32>
    %152 = tpu.matmul %149, %150, %cst_53 {dimension_numbers = #tpu.dot_dimension_numbers<[1], [1], [0], [0], [0, 0, 1, 0], [], []>} : vector<8x32xbf16>, vector<8x32xbf16>, vector<8x8xf32> -> vector<8x8xf32>
    %153 = arith.addf %152, %50 : vector<8x8xf32>
    %cst_54 = arith.constant dense<0xFF800000> : vector<8xf32>
    %154 = vector.multi_reduction <maximumf>, %153, %cst_54 [1] : vector<8x8xf32> to vector<8xf32>
    %155 = vector.shape_cast %154 : vector<8xf32> to vector<8x1xf32>
    %156 = vector.broadcast %155 : vector<8x1xf32> to vector<8x8xf32>
    %157 = arith.subf %153, %156 : vector<8x8xf32>
    %158 = math.exp %157 : vector<8x8xf32>
    %cst_55 = arith.constant dense<0.000000e+00> : vector<8xf32>
    %159 = vector.multi_reduction <add>, %158, %cst_55 [1] : vector<8x8xf32> to vector<8xf32>
    %160 = vector.shape_cast %159 : vector<8xf32> to vector<8x1xf32>
    %161 = tpu.reciprocal %160 {approx = true} : vector<8x1xf32> -> vector<8x1xf32>
    %162 = vector.broadcast %161 : vector<8x1xf32> to vector<8x8xf32>
    %163 = arith.mulf %158, %162 : vector<8x8xf32>
    %164 = arith.truncf %163 : vector<8x8xf32> to vector<8x8xbf16>
    %cst_56 = arith.constant dense<0.000000e+00> : vector<8x32xf32>
    %165 = tpu.matmul %164, %151, %cst_56 {dimension_numbers = #tpu.dot_dimension_numbers<[1], [0], [0], [1], [0, 0, 1, 1], [], []>} : vector<8x8xbf16>, vector<8x32xbf16>, vector<8x32xf32> -> vector<8x32xf32>
    %166 = arith.truncf %165 : vector<8x32xf32> to vector<8x32xbf16>
    %c8_57 = arith.constant 8 : index
    %c32_58 = arith.constant 32 : index
    %167 = vector.load %arg19[%c8_57, %c32_58] : memref<16x128xbf16, #tpu.memory_space<vmem>>, vector<8x32xbf16>
    tpu.vector_store %arg19[%c8_57, %c32_58], %166 {strides = array<i32>} : memref<16x128xbf16, #tpu.memory_space<vmem>>, vector<8x32xbf16>,
    %168 = vector.extract_strided_slice %51 {offsets = [8, 64], sizes = [8, 32], strides = [1, 1]} : vector<16x128xbf16> to vector<8x32xbf16>
    %169 = vector.extract_strided_slice %52 {offsets = [8, 64], sizes = [8, 32], strides = [1, 1]} : vector<16x128xbf16> to vector<8x32xbf16>
    %170 = vector.extract_strided_slice %53 {offsets = [8, 64], sizes = [8, 32], strides = [1, 1]} : vector<16x128xbf16> to vector<8x32xbf16>
    %cst_59 = arith.constant dense<0.000000e+00> : vector<8x8xf32>
    %171 = tpu.matmul %168, %169, %cst_59 {dimension_numbers = #tpu.dot_dimension_numbers<[1], [1], [0], [0], [0, 0, 1, 0], [], []>} : vector<8x32xbf16>, vector<8x32xbf16>, vector<8x8xf32> -> vector<8x8xf32>
    %172 = arith.addf %171, %50 : vector<8x8xf32>
    %cst_60 = arith.constant dense<0xFF800000> : vector<8xf32>
    %173 = vector.multi_reduction <maximumf>, %172, %cst_60 [1] : vector<8x8xf32> to vector<8xf32>
    %174 = vector.shape_cast %173 : vector<8xf32> to vector<8x1xf32>
    %175 = vector.broadcast %174 : vector<8x1xf32> to vector<8x8xf32>
    %176 = arith.subf %172, %175 : vector<8x8xf32>
    %177 = math.exp %176 : vector<8x8xf32>
    %cst_61 = arith.constant dense<0.000000e+00> : vector<8xf32>
    %178 = vector.multi_reduction <add>, %177, %cst_61 [1] : vector<8x8xf32> to vector<8xf32>
    %179 = vector.shape_cast %178 : vector<8xf32> to vector<8x1xf32>
    %180 = tpu.reciprocal %179 {approx = true} : vector<8x1xf32> -> vector<8x1xf32>
    %181 = vector.broadcast %180 : vector<8x1xf32> to vector<8x8xf32>
    %182 = arith.mulf %177, %181 : vector<8x8xf32>
    %183 = arith.truncf %182 : vector<8x8xf32> to vector<8x8xbf16>
    %cst_62 = arith.constant dense<0.000000e+00> : vector<8x32xf32>
    %184 = tpu.matmul %183, %170, %cst_62 {dimension_numbers = #tpu.dot_dimension_numbers<[1], [0], [0], [1], [0, 0, 1, 1], [], []>} : vector<8x8xbf16>, vector<8x32xbf16>, vector<8x32xf32> -> vector<8x32xf32>
    %185 = arith.truncf %184 : vector<8x32xf32> to vector<8x32xbf16>
    %c8_63 = arith.constant 8 : index
    %c64_64 = arith.constant 64 : index
    %186 = vector.load %arg19[%c8_63, %c64_64] : memref<16x128xbf16, #tpu.memory_space<vmem>>, vector<8x32xbf16>
    tpu.vector_store %arg19[%c8_63, %c64_64], %185 {strides = array<i32>} : memref<16x128xbf16, #tpu.memory_space<vmem>>, vector<8x32xbf16>,
    %187 = vector.extract_strided_slice %51 {offsets = [8, 96], sizes = [8, 32], strides = [1, 1]} : vector<16x128xbf16> to vector<8x32xbf16>
    %188 = vector.extract_strided_slice %52 {offsets = [8, 96], sizes = [8, 32], strides = [1, 1]} : vector<16x128xbf16> to vector<8x32xbf16>
    %189 = vector.extract_strided_slice %53 {offsets = [8, 96], sizes = [8, 32], strides = [1, 1]} : vector<16x128xbf16> to vector<8x32xbf16>
    %cst_65 = arith.constant dense<0.000000e+00> : vector<8x8xf32>
    %190 = tpu.matmul %187, %188, %cst_65 {dimension_numbers = #tpu.dot_dimension_numbers<[1], [1], [0], [0], [0, 0, 1, 0], [], []>} : vector<8x32xbf16>, vector<8x32xbf16>, vector<8x8xf32> -> vector<8x8xf32>
    %191 = arith.addf %190, %50 : vector<8x8xf32>
    %cst_66 = arith.constant dense<0xFF800000> : vector<8xf32>
    %192 = vector.multi_reduction <maximumf>, %191, %cst_66 [1] : vector<8x8xf32> to vector<8xf32>
    %193 = vector.shape_cast %192 : vector<8xf32> to vector<8x1xf32>
    %194 = vector.broadcast %193 : vector<8x1xf32> to vector<8x8xf32>
    %195 = arith.subf %191, %194 : vector<8x8xf32>
    %196 = math.exp %195 : vector<8x8xf32>
    %cst_67 = arith.constant dense<0.000000e+00> : vector<8xf32>
    %197 = vector.multi_reduction <add>, %196, %cst_67 [1] : vector<8x8xf32> to vector<8xf32>
    %198 = vector.shape_cast %197 : vector<8xf32> to vector<8x1xf32>
    %199 = tpu.reciprocal %198 {approx = true} : vector<8x1xf32> -> vector<8x1xf32>
    %200 = vector.broadcast %199 : vector<8x1xf32> to vector<8x8xf32>
    %201 = arith.mulf %196, %200 : vector<8x8xf32>
    %202 = arith.truncf %201 : vector<8x8xf32> to vector<8x8xbf16>
    %cst_68 = arith.constant dense<0.000000e+00> : vector<8x32xf32>
    %203 = tpu.matmul %202, %189, %cst_68 {dimension_numbers = #tpu.dot_dimension_numbers<[1], [0], [0], [1], [0, 0, 1, 1], [], []>} : vector<8x8xbf16>, vector<8x32xbf16>, vector<8x32xf32> -> vector<8x32xf32>
    %204 = arith.truncf %203 : vector<8x32xf32> to vector<8x32xbf16>
    %c8_69 = arith.constant 8 : index
    %c96_70 = arith.constant 96 : index
    %205 = vector.load %arg19[%c8_69, %c96_70] : memref<16x128xbf16, #tpu.memory_space<vmem>>, vector<8x32xbf16>
    tpu.vector_store %arg19[%c8_69, %c96_70], %204 {strides = array<i32>} : memref<16x128xbf16, #tpu.memory_space<vmem>>, vector<8x32xbf16>,
    %c0_71 = arith.constant 0 : index
    %c0_72 = arith.constant 0 : index
    %206 = vector.load %arg19[%c0_71, %c0_72] : memref<16x128xbf16, #tpu.memory_space<vmem>>, vector<16x128xbf16>
    %c0_73 = arith.constant 0 : index
    %c0_74 = arith.constant 0 : index
    %207 = vector.load %arg10[%c0_73, %c0_74] : memref<128x128xbf16, #tpu.memory_space<vmem>>, vector<128x128xbf16>
    %cst_75 = arith.constant dense<0.000000e+00> : vector<16x128xf32>
    %208 = tpu.matmul %206, %207, %cst_75 {dimension_numbers = #tpu.dot_dimension_numbers<[1], [0], [0], [1], [0, 0, 1, 1], [], []>} : vector<16x128xbf16>, vector<128x128xbf16>, vector<16x128xf32> -> vector<16x128xf32>
    %c0_76 = arith.constant 0 : index
    %c0_77 = arith.constant 0 : index
    %209 = vector.load %arg11[%c0_76, %c0_77] : memref<1x128xf32, #tpu.memory_space<vmem>>, vector<1x128xf32>
    %210 = vector.broadcast %209 : vector<1x128xf32> to vector<16x128xf32>
    %211 = arith.addf %208, %210 : vector<16x128xf32>
    %212 = arith.addf %0, %211 : vector<16x128xf32>
    %c0_78 = arith.constant 0 : index
    %c0_79 = arith.constant 0 : index
    %213 = vector.load %arg12[%c0_78, %c0_79] : memref<1x128xf32, #tpu.memory_space<vmem>>, vector<1x128xf32>
    %c0_80 = arith.constant 0 : index
    %c0_81 = arith.constant 0 : index
    %214 = vector.load %arg13[%c0_80, %c0_81] : memref<1x128xf32, #tpu.memory_space<vmem>>, vector<1x128xf32>
    %cst_82 = arith.constant dense<0.000000e+00> : vector<16xf32>
    %215 = vector.multi_reduction <add>, %212, %cst_82 [1] : vector<16x128xf32> to vector<16xf32>
    %216 = vector.shape_cast %215 : vector<16xf32> to vector<16x1xf32>
    %cst_83 = arith.constant 1.280000e+02 : f32
    %217 = vector.broadcast %cst_83 : f32 to vector<16x1xf32>
    %218 = arith.divf %216, %217 : vector<16x1xf32>
    %219 = vector.broadcast %218 : vector<16x1xf32> to vector<16x128xf32>
    %220 = arith.subf %212, %219 : vector<16x128xf32>
    %221 = vector.broadcast %218 : vector<16x1xf32> to vector<16x128xf32>
    %222 = arith.subf %212, %221 : vector<16x128xf32>
    %223 = arith.mulf %220, %222 : vector<16x128xf32>
    %cst_84 = arith.constant dense<0.000000e+00> : vector<16xf32>
    %224 = vector.multi_reduction <add>, %223, %cst_84 [1] : vector<16x128xf32> to vector<16xf32>
    %225 = vector.shape_cast %224 : vector<16xf32> to vector<16x1xf32>
    %cst_85 = arith.constant 1.280000e+02 : f32
    %226 = vector.broadcast %cst_85 : f32 to vector<16x1xf32>
    %227 = arith.divf %225, %226 : vector<16x1xf32>
    %228 = vector.broadcast %218 : vector<16x1xf32> to vector<16x128xf32>
    %229 = arith.subf %212, %228 : vector<16x128xf32>
    %cst_86 = arith.constant 9.99999974E-6 : f32
    %230 = vector.broadcast %cst_86 : f32 to vector<16x1xf32>
    %231 = arith.addf %227, %230 : vector<16x1xf32>
    %232 = math.rsqrt %231 : vector<16x1xf32>
    %233 = vector.broadcast %232 : vector<16x1xf32> to vector<16x128xf32>
    %234 = arith.mulf %229, %233 : vector<16x128xf32>
    %235 = vector.broadcast %213 : vector<1x128xf32> to vector<16x128xf32>
    %236 = arith.mulf %234, %235 : vector<16x128xf32>
    %237 = vector.broadcast %214 : vector<1x128xf32> to vector<16x128xf32>
    %238 = arith.addf %236, %237 : vector<16x128xf32>
    %239 = arith.truncf %238 : vector<16x128xf32> to vector<16x128xbf16>
    %c0_87 = arith.constant 0 : index
    %c0_88 = arith.constant 0 : index
    %240 = vector.load %arg14[%c0_87, %c0_88] : memref<128x512xbf16, #tpu.memory_space<vmem>>, vector<128x512xbf16>
    %cst_89 = arith.constant dense<0.000000e+00> : vector<16x512xf32>
    %241 = tpu.matmul %239, %240, %cst_89 {dimension_numbers = #tpu.dot_dimension_numbers<[1], [0], [0], [1], [0, 0, 1, 1], [], []>} : vector<16x128xbf16>, vector<128x512xbf16>, vector<16x512xf32> -> vector<16x512xf32>
    %c0_90 = arith.constant 0 : index
    %c0_91 = arith.constant 0 : index
    %242 = vector.load %arg15[%c0_90, %c0_91] : memref<1x512xf32, #tpu.memory_space<vmem>>, vector<1x512xf32>
    %243 = vector.broadcast %242 : vector<1x512xf32> to vector<16x512xf32>
    %244 = arith.addf %241, %243 : vector<16x512xf32>
    %cst_92 = arith.constant 5.000000e-01 : f32
    %245 = vector.broadcast %cst_92 : f32 to vector<16x512xf32>
    %246 = arith.mulf %245, %244 : vector<16x512xf32>
    %cst_93 = arith.constant 0.707106769 : f32
    %247 = vector.broadcast %cst_93 : f32 to vector<16x512xf32>
    %248 = arith.mulf %244, %247 : vector<16x512xf32>
    %cst_94 = arith.constant 0.000000e+00 : f32
    %249 = vector.broadcast %cst_94 : f32 to vector<16x512xf32>
    %250 = arith.cmpf olt, %248, %249 : vector<16x512xf32>
    %cst_95 = arith.constant -1.000000e+00 : f32
    %cst_96 = arith.constant 1.000000e+00 : f32
    %251 = vector.broadcast %cst_95 : f32 to vector<16x512xf32>
    %252 = vector.broadcast %cst_96 : f32 to vector<16x512xf32>
    %253 = arith.select %250, %251, %252 : vector<16x512xi1>, vector<16x512xf32>
    %254 = math.absf %248 : vector<16x512xf32>
    %cst_97 = arith.constant 0.327591091 : f32
    %255 = vector.broadcast %cst_97 : f32 to vector<16x512xf32>
    %256 = arith.mulf %255, %254 : vector<16x512xf32>
    %cst_98 = arith.constant 1.000000e+00 : f32
    %257 = vector.broadcast %cst_98 : f32 to vector<16x512xf32>
    %258 = arith.addf %257, %256 : vector<16x512xf32>
    %259 = tpu.reciprocal %258 {approx = true} : vector<16x512xf32> -> vector<16x512xf32>
    %cst_99 = arith.constant 1.06140542 : f32
    %260 = vector.broadcast %cst_99 : f32 to vector<16x512xf32>
    %261 = arith.mulf %259, %260 : vector<16x512xf32>
    %cst_100 = arith.constant -1.45315206 : f32
    %262 = vector.broadcast %cst_100 : f32 to vector<16x512xf32>
    %263 = arith.addf %262, %261 : vector<16x512xf32>
    %264 = arith.mulf %259, %263 : vector<16x512xf32>
    %cst_101 = arith.constant 1.42141378 : f32
    %265 = vector.broadcast %cst_101 : f32 to vector<16x512xf32>
    %266 = arith.addf %265, %264 : vector<16x512xf32>
    %267 = arith.mulf %259, %266 : vector<16x512xf32>
    %cst_102 = arith.constant -0.284496725 : f32
    %268 = vector.broadcast %cst_102 : f32 to vector<16x512xf32>
    %269 = arith.addf %268, %267 : vector<16x512xf32>
    %270 = arith.mulf %259, %269 : vector<16x512xf32>
    %cst_103 = arith.constant 0.254829586 : f32
    %271 = vector.broadcast %cst_103 : f32 to vector<16x512xf32>
    %272 = arith.addf %271, %270 : vector<16x512xf32>
    %273 = arith.mulf %259, %272 : vector<16x512xf32>
    %cst_104 = arith.constant 0.000000e+00 : f32
    %274 = vector.broadcast %cst_104 : f32 to vector<16x512xf32>
    %275 = arith.subf %274, %254 : vector<16x512xf32>
    %276 = arith.mulf %275, %254 : vector<16x512xf32>
    %277 = math.exp %276 : vector<16x512xf32>
    %278 = arith.mulf %273, %277 : vector<16x512xf32>
    %cst_105 = arith.constant 1.000000e+00 : f32
    %279 = vector.broadcast %cst_105 : f32 to vector<16x512xf32>
    %280 = arith.subf %279, %278 : vector<16x512xf32>
    %281 = arith.mulf %253, %280 : vector<16x512xf32>
    %cst_106 = arith.constant 1.000000e+00 : f32
    %282 = vector.broadcast %cst_106 : f32 to vector<16x512xf32>
    %283 = arith.addf %282, %281 : vector<16x512xf32>
    %284 = arith.mulf %246, %283 : vector<16x512xf32>
    %285 = arith.truncf %284 : vector<16x512xf32> to vector<16x512xbf16>
    %c0_107 = arith.constant 0 : index
    %c0_108 = arith.constant 0 : index
    %286 = vector.load %arg16[%c0_107, %c0_108] : memref<512x128xbf16, #tpu.memory_space<vmem>>, vector<512x128xbf16>
    %cst_109 = arith.constant dense<0.000000e+00> : vector<16x128xf32>
    %287 = tpu.matmul %285, %286, %cst_109 {dimension_numbers = #tpu.dot_dimension_numbers<[1], [0], [0], [1], [0, 0, 1, 1], [], []>} : vector<16x512xbf16>, vector<512x128xbf16>, vector<16x128xf32> -> vector<16x128xf32>
    %c0_110 = arith.constant 0 : index
    %c0_111 = arith.constant 0 : index
    %288 = vector.load %arg17[%c0_110, %c0_111] : memref<1x128xf32, #tpu.memory_space<vmem>>, vector<1x128xf32>
    %289 = vector.broadcast %288 : vector<1x128xf32> to vector<16x128xf32>
    %290 = arith.addf %287, %289 : vector<16x128xf32>
    %291 = arith.addf %212, %290 : vector<16x128xf32>
    %c0_112 = arith.constant 0 : index
    %c0_113 = arith.constant 0 : index
    %292 = vector.load %arg18[%c0_112, %c0_113] : memref<16x128xf32, #tpu.memory_space<vmem>>, vector<16x128xf32>
    tpu.vector_store %arg18[%c0_112, %c0_113], %291 {strides = array<i32>} : memref<16x128xf32, #tpu.memory_space<vmem>>, vector<16x128xf32>,
    return
  }
  func.func @transform_0(%arg0: i32) -> (i32, i32) {
    %c0_i32 = arith.constant 0 : i32
    %c0_i32_0 = arith.constant 0 : i32
    return %arg0, %c0_i32 : i32, i32
  }
  func.func @transform_1(%arg0: i32) -> (i32, i32) {
    %c0_i32 = arith.constant 0 : i32
    %c0_i32_0 = arith.constant 0 : i32
    %c0_i32_1 = arith.constant 0 : i32
    return %c0_i32, %c0_i32_0 : i32, i32
  }
  func.func @transform_2(%arg0: i32) -> (i32, i32) {
    %c0_i32 = arith.constant 0 : i32
    %c0_i32_0 = arith.constant 0 : i32
    %c0_i32_1 = arith.constant 0 : i32
    return %c0_i32, %c0_i32_0 : i32, i32
  }
  func.func @transform_3(%arg0: i32) -> (i32, i32) {
    %c0_i32 = arith.constant 0 : i32
    %c0_i32_0 = arith.constant 0 : i32
    %c0_i32_1 = arith.constant 0 : i32
    return %c0_i32, %c0_i32_0 : i32, i32
  }
  func.func @transform_4(%arg0: i32) -> (i32, i32) {
    %c0_i32 = arith.constant 0 : i32
    %c0_i32_0 = arith.constant 0 : i32
    %c0_i32_1 = arith.constant 0 : i32
    return %c0_i32, %c0_i32_0 : i32, i32
  }
  func.func @transform_5(%arg0: i32) -> (i32, i32) {
    %c0_i32 = arith.constant 0 : i32
    %c0_i32_0 = arith.constant 0 : i32
    %c0_i32_1 = arith.constant 0 : i32
    return %c0_i32, %c0_i32_0 : i32, i32
  }
  func.func @transform_6(%arg0: i32) -> (i32, i32) {
    %c0_i32 = arith.constant 0 : i32
    %c0_i32_0 = arith.constant 0 : i32
    %c0_i32_1 = arith.constant 0 : i32
    return %c0_i32, %c0_i32_0 : i32, i32
  }
  func.func @transform_7(%arg0: i32) -> (i32, i32) {
    %c0_i32 = arith.constant 0 : i32
    %c0_i32_0 = arith.constant 0 : i32
    %c0_i32_1 = arith.constant 0 : i32
    return %c0_i32, %c0_i32_0 : i32, i32
  }
  func.func @transform_8(%arg0: i32) -> (i32, i32) {
    %c0_i32 = arith.constant 0 : i32
    %c0_i32_0 = arith.constant 0 : i32
    %c0_i32_1 = arith.constant 0 : i32
    return %c0_i32, %c0_i32_0 : i32, i32
  }
  func.func @transform_9(%arg0: i32) -> (i32, i32) {
    %c0_i32 = arith.constant 0 : i32
    %c0_i32_0 = arith.constant 0 : i32
    %c0_i32_1 = arith.constant 0 : i32
    return %c0_i32, %c0_i32_0 : i32, i32
  }
  func.func @transform_10(%arg0: i32) -> (i32, i32) {
    %c0_i32 = arith.constant 0 : i32
    %c0_i32_0 = arith.constant 0 : i32
    %c0_i32_1 = arith.constant 0 : i32
    return %c0_i32, %c0_i32_0 : i32, i32
  }
  func.func @transform_11(%arg0: i32) -> (i32, i32) {
    %c0_i32 = arith.constant 0 : i32
    %c0_i32_0 = arith.constant 0 : i32
    %c0_i32_1 = arith.constant 0 : i32
    return %c0_i32, %c0_i32_0 : i32, i32
  }
  func.func @transform_12(%arg0: i32) -> (i32, i32) {
    %c0_i32 = arith.constant 0 : i32
    %c0_i32_0 = arith.constant 0 : i32
    %c0_i32_1 = arith.constant 0 : i32
    return %c0_i32, %c0_i32_0 : i32, i32
  }
  func.func @transform_13(%arg0: i32) -> (i32, i32) {
    %c0_i32 = arith.constant 0 : i32
    %c0_i32_0 = arith.constant 0 : i32
    %c0_i32_1 = arith.constant 0 : i32
    return %c0_i32, %c0_i32_0 : i32, i32
  }
  func.func @transform_14(%arg0: i32) -> (i32, i32) {
    %c0_i32 = arith.constant 0 : i32
    %c0_i32_0 = arith.constant 0 : i32
    %c0_i32_1 = arith.constant 0 : i32
    return %c0_i32, %c0_i32_0 : i32, i32
  }
  func.func @transform_15(%arg0: i32) -> (i32, i32) {
    %c0_i32 = arith.constant 0 : i32
    %c0_i32_0 = arith.constant 0 : i32
    %c0_i32_1 = arith.constant 0 : i32
    return %c0_i32, %c0_i32_0 : i32, i32
  }
  func.func @transform_16(%arg0: i32) -> (i32, i32) {
    %c0_i32 = arith.constant 0 : i32
    %c0_i32_0 = arith.constant 0 : i32
    %c0_i32_1 = arith.constant 0 : i32
    return %c0_i32, %c0_i32_0 : i32, i32
  }
  func.func @transform_17(%arg0: i32) -> (i32, i32) {
    %c0_i32 = arith.constant 0 : i32
    %c0_i32_0 = arith.constant 0 : i32
    return %arg0, %c0_i32 : i32, i32
  }
}

</mosaic_0001>

<llo_original>
// kernel: tpu_custom_call.1
$region0: #{tpu_custom_call.1}
  #allocation0 [shape = 'u32[]', space=smem, size = 0x4, offset = 0x4, fixed_abs, tag = 'smem constant byte address 0x4 - core index']
  #allocation1 [shape = 'u32[72,128]{1,0:T(1,128)}', space=vmem, size = 0x9000, scoped, tag = 'internal scratch']
  #allocation2 [shape = 'bf16[16,128]{1,0:T(8,128)(2,1)}', space=vmem, size = 0x1000, scoped, tag = 'scratch operand']
  %s0 = inlined_call_operand.hbm [shape: f32[16,128], index: 0, kind: input, shape index: {}]
  %s1 = inlined_call_operand.hbm [shape: f32[1,128], index: 1, kind: input, shape index: {}]
  %s2 = inlined_call_operand.vmem [shape: f32[1,128], index: 2, kind: input, shape index: {}]
  %s3 = inlined_call_operand.hbm [shape: bf16[128,128], index: 3, kind: input, shape index: {}]
  %s4 = inlined_call_operand.vmem [shape: f32[1,128], index: 4, kind: input, shape index: {}]
  %s5 = inlined_call_operand.hbm [shape: bf16[128,128], index: 5, kind: input, shape index: {}]
  %s6 = inlined_call_operand.vmem [shape: f32[1,128], index: 6, kind: input, shape index: {}]
  %s7 = inlined_call_operand.hbm [shape: bf16[128,128], index: 7, kind: input, shape index: {}]
  %s8 = inlined_call_operand.hbm [shape: f32[1,128], index: 8, kind: input, shape index: {}]
  %s9 = inlined_call_operand.hbm [shape: bf16[128,128], index: 9, kind: input, shape index: {}]
  %s10 = inlined_call_operand.vmem [shape: f32[1,128], index: 10, kind: input, shape index: {}]
  %s11 = inlined_call_operand.vmem [shape: f32[1,128], index: 11, kind: input, shape index: {}]
  %s12 = inlined_call_operand.vmem [shape: f32[1,128], index: 12, kind: input, shape index: {}]
  %s13 = inlined_call_operand.hbm [shape: bf16[128,512], index: 13, kind: input, shape index: {}]
  %s14 = inlined_call_operand.vmem [shape: f32[1,512], index: 14, kind: input, shape index: {}]
  %s15 = inlined_call_operand.hbm [shape: bf16[512,128], index: 15, kind: input, shape index: {}]
  %s16 = inlined_call_operand.vmem [shape: f32[1,128], index: 16, kind: input, shape index: {}]
  %s17 = inlined_call_operand.hbm [shape: f32[16,128], index: 17, kind: output, shape index: {}]
  %s18 = sld [smem:[#allocation0]]
  $region114: #{tpu_custom_call.1} parent=0
    _
  %s20 = ssub.s32 1, %s18
  %s21 = scalar_select 0, %s20, %s18
  $region1: #{tpu_custom_call.1} parent=0
    #allocation3 [shape = 'u8[8192]{0}', space=vmem, size = 0x2000, scoped, tag = 'input window, operand 0, single buffered']
    #allocation4 [shape = 's32[1]{0}', space=sflag, size = 0x4, scoped, tag = 'scoped memory for tpu_custom_call.1']
    #allocation5 [shape = 's32[1]{0}', space=sflag, size = 0x4, scoped, tag = 'scoped memory for tpu_custom_call.1']
    #allocation6 [shape = 'u8[512]{0}', space=vmem, size = 0x400, scoped, tag = 'input window, operand 1, single buffered']
    #allocation7 [shape = 's32[1]{0}', space=sflag, size = 0x4, scoped, tag = 'scoped memory for tpu_custom_call.1']
    #allocation8 [shape = 'u8[32768]{0}', space=vmem, size = 0x8000, scoped, tag = 'input window, operand 3, single buffered']
    #allocation9 [shape = 'u8[32768]{0}', space=vmem, size = 0x8000, scoped, tag = 'input window, operand 5, single buffered']
    #allocation10 [shape = 's32[1]{0}', space=sflag, size = 0x4, scoped, tag = 'scoped memory for tpu_custom_call.1']
    #allocation11 [shape = 'u8[32768]{0}', space=vmem, size = 0x8000, scoped, tag = 'input window, operand 7, single buffered']
    #allocation12 [shape = 'u8[512]{0}', space=vmem, size = 0x400, scoped, tag = 'input window, operand 8, single buffered']
    #allocation13 [shape = 's32[1]{0}', space=sflag, size = 0x4, scoped, tag = 'scoped memory for tpu_custom_call.1']
    #allocation14 [shape = 'u8[32768]{0}', space=vmem, size = 0x8000, scoped, tag = 'input window, operand 9, single buffered']
    #allocation15 [shape = 'u8[131072]{0}', space=vmem, size = 0x20000, scoped, tag = 'input window, operand 13, single buffered']
    #allocation16 [shape = 's32[1]{0}', space=sflag, size = 0x4, scoped, tag = 'scoped memory for tpu_custom_call.1']
    #allocation17 [shape = 'u8[131072]{0}', space=vmem, size = 0x20000, scoped, tag = 'input window, operand 15, single buffered']
    #allocation18 [shape = 'u8[8192]{0}', space=vmem, size = 0x2000, scoped, tag = 'output window, operand 0, single buffered']
    %22 = vsyncpa [#allocation4], 0
    %23 = vsyncpa [#allocation7], 0
    %24 = vsyncpa [#allocation10], 0
    %25 = vsyncpa [#allocation13], 0
    %26 = vsyncpa [#allocation16], 0
    %27 = vsyncpa [#allocation5], 0
    // Predicated region
    $region2: #{tpu_custom_call.1} parent=1 // pred_check
      _
    $region3: #{tpu_custom_call.1} parent=1 // pred_check_branch
      %29 = sbr.rel (0) target = $region5
    $region4: #{tpu_custom_call.1} parent=1 // pred_region
      %31 = vsyncadd [#allocation4], 0
      %s32 = sshll.u32 %s0, 4
      %s33 = int_to_ptr.hbm [resolvable:$true] %s32
      %s34 = sshll.u32 [#allocation3], 4
      %s35 = int_to_ptr.vmem [resolvable:$true] %s34
      %40 = dma.hbm_to_vmem [thread:$0]  %s33, 256, %s35, [#allocation4], 128, 128, 8
    $region5: #{tpu_custom_call.1} parent=1 // pred_fallthru
      _
    // Predicated region
    $region6: #{tpu_custom_call.1} parent=1 // pred_check
      _
    $region7: #{tpu_custom_call.1} parent=1 // pred_check_branch
      %42 = sbr.rel (0) target = $region9
    $region8: #{tpu_custom_call.1} parent=1 // pred_region
      %44 = vsyncadd [#allocation7], 0
      %s46 = sshll.u32 %s1, 4
      %s47 = int_to_ptr.hbm [resolvable:$true] %s46
      %s48 = sshll.u32 [#allocation6], 4
      %s49 = int_to_ptr.vmem [resolvable:$true] %s48
      %51 = dma.hbm_to_vmem [thread:$0]  %s47, 16, %s49, [#allocation7]
    $region9: #{tpu_custom_call.1} parent=1 // pred_fallthru
      _
    // Predicated region
    $region10: #{tpu_custom_call.1} parent=1 // pred_check
      _
    $region11: #{tpu_custom_call.1} parent=1 // pred_check_branch
      %53 = sbr.rel (0) target = $region13
    $region12: #{tpu_custom_call.1} parent=1 // pred_region
      _
    $region13: #{tpu_custom_call.1} parent=1 // pred_fallthru
      _
    // Predicated region
    $region14: #{tpu_custom_call.1} parent=1 // pred_check
      _
    $region15: #{tpu_custom_call.1} parent=1 // pred_check_branch
      %55 = sbr.rel (0) target = $region17
    $region16: #{tpu_custom_call.1} parent=1 // pred_region
      %57 = vsyncadd [#allocation7], 0
      %s58 = sshll.u32 %s3, 4
      %s59 = int_to_ptr.hbm [resolvable:$true] %s58
      %s60 = sshll.u32 [#allocation8], 4
      %s61 = int_to_ptr.vmem [resolvable:$true] %s60
      %66 = dma.hbm_to_vmem [thread:$0]  %s59, 1024, %s61, [#allocation7], 64, 64, 4
    $region17: #{tpu_custom_call.1} parent=1 // pred_fallthru
      _
    // Predicated region
    $region18: #{tpu_custom_call.1} parent=1 // pred_check
      _
    $region19: #{tpu_custom_call.1} parent=1 // pred_check_branch
      %68 = sbr.rel (0) target = $region21
    $region20: #{tpu_custom_call.1} parent=1 // pred_region
      _
    $region21: #{tpu_custom_call.1} parent=1 // pred_fallthru
      _
    // Predicated region
    $region22: #{tpu_custom_call.1} parent=1 // pred_check
      _
    $region23: #{tpu_custom_call.1} parent=1 // pred_check_branch
      %70 = sbr.rel (0) target = $region25
    $region24: #{tpu_custom_call.1} parent=1 // pred_region
      %72 = vsyncadd [#allocation10], 0
      %s73 = sshll.u32 %s5, 4
      %s74 = int_to_ptr.hbm [resolvable:$true] %s73
      %s75 = sshll.u32 [#allocation9], 4
      %s76 = int_to_ptr.vmem [resolvable:$true] %s75
      %81 = dma.hbm_to_vmem [thread:$0]  %s74, 1024, %s76, [#allocation10], 64, 64, 4
    $region25: #{tpu_custom_call.1} parent=1 // pred_fallthru
      _
    // Predicated region
    $region26: #{tpu_custom_call.1} parent=1 // pred_check
      _
    $region27: #{tpu_custom_call.1} parent=1 // pred_check_branch
      %83 = sbr.rel (0) target = $region29
    $region28: #{tpu_custom_call.1} parent=1 // pred_region
      _
    $region29: #{tpu_custom_call.1} parent=1 // pred_fallthru
      _
    // Predicated region
    $region30: #{tpu_custom_call.1} parent=1 // pred_check
      _
    $region31: #{tpu_custom_call.1} parent=1 // pred_check_branch
      %85 = sbr.rel (0) target = $region33
    $region32: #{tpu_custom_call.1} parent=1 // pred_region
      %87 = vsyncadd [#allocation10], 0
      %s88 = sshll.u32 %s7, 4
      %s89 = int_to_ptr.hbm [resolvable:$true] %s88
      %s90 = sshll.u32 [#allocation11], 4
      %s91 = int_to_ptr.vmem [resolvable:$true] %s90
      %96 = dma.hbm_to_vmem [thread:$0]  %s89, 1024, %s91, [#allocation10], 64, 64, 4
    $region33: #{tpu_custom_call.1} parent=1 // pred_fallthru
      _
    // Predicated region
    $region34: #{tpu_custom_call.1} parent=1 // pred_check
      _
    $region35: #{tpu_custom_call.1} parent=1 // pred_check_branch
      %98 = sbr.rel (0) target = $region37
    $region36: #{tpu_custom_call.1} parent=1 // pred_region
      %100 = vsyncadd [#allocation13], 0
      %s102 = sshll.u32 %s8, 4
      %s103 = int_to_ptr.hbm [resolvable:$true] %s102
      %s104 = sshll.u32 [#allocation12], 4
      %s105 = int_to_ptr.vmem [resolvable:$true] %s104
      %107 = dma.hbm_to_vmem [thread:$0]  %s103, 16, %s105, [#allocation13]
    $region37: #{tpu_custom_call.1} parent=1 // pred_fallthru
      _
    // Predicated region
    $region38: #{tpu_custom_call.1} parent=1 // pred_check
      _
    $region39: #{tpu_custom_call.1} parent=1 // pred_check_branch
      %109 = sbr.rel (0) target = $region41
    $region40: #{tpu_custom_call.1} parent=1 // pred_region
      %111 = vsyncadd [#allocation13], 0
      %s112 = sshll.u32 %s9, 4
      %s113 = int_to_ptr.hbm [resolvable:$true] %s112
      %s114 = sshll.u32 [#allocation14], 4
      %s115 = int_to_ptr.vmem [resolvable:$true] %s114
      %120 = dma.hbm_to_vmem [thread:$0]  %s113, 1024, %s115, [#allocation13], 64, 64, 4
    $region41: #{tpu_custom_call.1} parent=1 // pred_fallthru
      _
    // Predicated region
    $region42: #{tpu_custom_call.1} parent=1 // pred_check
      _
    $region43: #{tpu_custom_call.1} parent=1 // pred_check_branch
      %122 = sbr.rel (0) target = $region45
    $region44: #{tpu_custom_call.1} parent=1 // pred_region
      _
    $region45: #{tpu_custom_call.1} parent=1 // pred_fallthru
      _
    // Predicated region
    $region46: #{tpu_custom_call.1} parent=1 // pred_check
      _
    $region47: #{tpu_custom_call.1} parent=1 // pred_check_branch
      %124 = sbr.rel (0) target = $region49
    $region48: #{tpu_custom_call.1} parent=1 // pred_region
      _
    $region49: #{tpu_custom_call.1} parent=1 // pred_fallthru
      _
    // Predicated region
    $region50: #{tpu_custom_call.1} parent=1 // pred_check
      _
    $region51: #{tpu_custom_call.1} parent=1 // pred_check_branch
      %126 = sbr.rel (0) target = $region53
    $region52: #{tpu_custom_call.1} parent=1 // pred_region
      _
    $region53: #{tpu_custom_call.1} parent=1 // pred_fallthru
      _
    // Predicated region
    $region54: #{tpu_custom_call.1} parent=1 // pred_check
      _
    $region55: #{tpu_custom_call.1} parent=1 // pred_check_branch
      %128 = sbr.rel (0) target = $region57
    $region56: #{tpu_custom_call.1} parent=1 // pred_region
      %130 = vsyncadd [#allocation16], 0
      %s131 = sshll.u32 %s13, 4
      %s132 = int_to_ptr.hbm [resolvable:$true] %s131
      %s133 = sshll.u32 [#allocation15], 4
      %s134 = int_to_ptr.vmem [resolvable:$true] %s133
      %139 = dma.hbm_to_vmem [thread:$0]  %s132, 4096, %s134, [#allocation16], 256, 256, 16
    $region57: #{tpu_custom_call.1} parent=1 // pred_fallthru
      _
    // Predicated region
    $region58: #{tpu_custom_call.1} parent=1 // pred_check
      _
    $region59: #{tpu_custom_call.1} parent=1 // pred_check_branch
      %141 = sbr.rel (0) target = $region61
    $region60: #{tpu_custom_call.1} parent=1 // pred_region
      _
    $region61: #{tpu_custom_call.1} parent=1 // pred_fallthru
      _
    // Predicated region
    $region62: #{tpu_custom_call.1} parent=1 // pred_check
      _
    $region63: #{tpu_custom_call.1} parent=1 // pred_check_branch
      %143 = sbr.rel (0) target = $region65
    $region64: #{tpu_custom_call.1} parent=1 // pred_region
      %145 = vsyncadd [#allocation16], 0
      %s146 = sshll.u32 %s15, 4
      %s147 = int_to_ptr.hbm [resolvable:$true] %s146
      %s148 = sshll.u32 [#allocation17], 4
      %s149 = int_to_ptr.vmem [resolvable:$true] %s148
      %154 = dma.hbm_to_vmem [thread:$0]  %s147, 4096, %s149, [#allocation16], 64, 64, 4
    $region65: #{tpu_custom_call.1} parent=1 // pred_fallthru
      _
    // Predicated region
    $region66: #{tpu_custom_call.1} parent=1 // pred_check
      _
    $region67: #{tpu_custom_call.1} parent=1 // pred_check_branch
      %156 = sbr.rel (0) target = $region69
    $region68: #{tpu_custom_call.1} parent=1 // pred_region
      _
    $region69: #{tpu_custom_call.1} parent=1 // pred_fallthru
      _
    // Predicated region
    $region70: #{tpu_custom_call.1} parent=1 // pred_check
      _
    $region71: #{tpu_custom_call.1} parent=1 // pred_check_branch
      %158 = sbr.rel (0) target = $region73
    $region72: #{tpu_custom_call.1} parent=1 // pred_region
      %160 = dma.done [#allocation4], 256
    $region73: #{tpu_custom_call.1} parent=1 // pred_fallthru
      _
    // Predicated region
    $region74: #{tpu_custom_call.1} parent=1 // pred_check
      _
    $region75: #{tpu_custom_call.1} parent=1 // pred_check_branch
      %162 = sbr.rel (0) target = $region77
    $region76: #{tpu_custom_call.1} parent=1 // pred_region
      %164 = dma.done [#allocation7], 16
    $region77: #{tpu_custom_call.1} parent=1 // pred_fallthru
      _
    // Predicated region
    $region78: #{tpu_custom_call.1} parent=1 // pred_check
      _
    $region79: #{tpu_custom_call.1} parent=1 // pred_check_branch
      %166 = sbr.rel (0) target = $region81
    $region80: #{tpu_custom_call.1} parent=1 // pred_region
      %168 = dma.done [#allocation7], 1024
    $region81: #{tpu_custom_call.1} parent=1 // pred_fallthru
      _
    // Predicated region
    $region82: #{tpu_custom_call.1} parent=1 // pred_check
      _
    $region83: #{tpu_custom_call.1} parent=1 // pred_check_branch
      %170 = sbr.rel (0) target = $region85
    $region84: #{tpu_custom_call.1} parent=1 // pred_region
      %172 = dma.done [#allocation10], 1024
    $region85: #{tpu_custom_call.1} parent=1 // pred_fallthru
      _
    // Predicated region
    $region86: #{tpu_custom_call.1} parent=1 // pred_check
      _
    $region87: #{tpu_custom_call.1} parent=1 // pred_check_branch
      %174 = sbr.rel (0) target = $region89
    $region88: #{tpu_custom_call.1} parent=1 // pred_region
      %176 = dma.done [#allocation10], 1024
    $region89: #{tpu_custom_call.1} parent=1 // pred_fallthru
      _
    // Predicated region
    $region90: #{tpu_custom_call.1} parent=1 // pred_check
      _
    $region91: #{tpu_custom_call.1} parent=1 // pred_check_branch
      %178 = sbr.rel (0) target = $region93
    $region92: #{tpu_custom_call.1} parent=1 // pred_region
      %180 = dma.done [#allocation13], 16
    $region93: #{tpu_custom_call.1} parent=1 // pred_fallthru
      _
    // Predicated region
    $region94: #{tpu_custom_call.1} parent=1 // pred_check
      _
    $region95: #{tpu_custom_call.1} parent=1 // pred_check_branch
      %182 = sbr.rel (0) target = $region97
    $region96: #{tpu_custom_call.1} parent=1 // pred_region
      %184 = dma.done [#allocation13], 1024
    $region97: #{tpu_custom_call.1} parent=1 // pred_fallthru
      _
    // Predicated region
    $region98: #{tpu_custom_call.1} parent=1 // pred_check
      _
    $region99: #{tpu_custom_call.1} parent=1 // pred_check_branch
      %186 = sbr.rel (0) target = $region101
    $region100: #{tpu_custom_call.1} parent=1 // pred_region
      %188 = dma.done [#allocation16], 4096
    $region101: #{tpu_custom_call.1} parent=1 // pred_fallthru
      _
    // Predicated region
    $region102: #{tpu_custom_call.1} parent=1 // pred_check
      _
    $region103: #{tpu_custom_call.1} parent=1 // pred_check_branch
      %190 = sbr.rel (0) target = $region105
    $region104: #{tpu_custom_call.1} parent=1 // pred_region
      %192 = dma.done [#allocation16], 4096
    $region105: #{tpu_custom_call.1} parent=1 // pred_fallthru
      _
    %v194 = vld [vmem:[#allocation3] sm:$0xff]
    %v195 = vld [vmem:[#allocation3 + $0x8] sm:$0xff]
    %v196 = vld [vmem:[#allocation6] sm:$0x1]
    %v197 = vld [vmem:[%s2] sm:$0x1]
    %198 = vadd.xlane.f32.xlu0 %v194
    %v199 = vpop.xlane.xlu0 %198
    %200 = vadd.xlane.f32.xlu0 %v195
    %v201 = vpop.xlane.xlu0 %200
    %v202 = vrcp.pop 128.0
    %v203 = vmul.f32 128.0, %v202
    %v204 = vsub.f32 1.0, %v203
    %v205 = vmul.f32 %v202, %v204
    %v206 = vadd.f32 %v202, %v205
    %vm207 = vweird.f32 %v202
    %v208 = vsel %vm207, %v202, %v206
    %v209 = vmul.f32 %v199, %v208
    %v210 = vmul.f32 %v201, %v208
    %v211 = vsub.f32 %v194, %v209
    %v212 = vsub.f32 %v195, %v210
    %v213 = vmul.f32 %v211, %v211
    %v214 = vmul.f32 %v212, %v212
    %215 = vadd.xlane.f32.xlu0 %v213
    %v216 = vpop.xlane.xlu0 %215
    %217 = vadd.xlane.f32.xlu0 %v214
    %v218 = vpop.xlane.xlu0 %217
    %v219 = vmul.f32 %v216, %v208
    %v220 = vmul.f32 %v218, %v208
    %v221 = vadd.f32 %v219, 1e-05
    %v222 = vadd.f32 %v220, 1e-05
    %v223 = vrsqrt.pop %v221
    %v224 = vmul.f32 %v223, %v221
    %v225 = vmul.f32 %v224, %v223
    %v226 = vmul.f32 0.5, %v225
    %v227 = vsub.f32 1.5, %v226
    %v228 = vmul.f32 %v223, %v227
    %vm229 = vweird.f32 %v221
    %vm230 = vweird.f32 %v223
    %vm231 = vmor %vm229, %vm230
    %v232 = vsel %vm231, %v223, %v228
    %v233 = vrsqrt.pop %v222
    %v234 = vmul.f32 %v233, %v222
    %v235 = vmul.f32 %v234, %v233
    %v236 = vmul.f32 0.5, %v235
    %v237 = vsub.f32 1.5, %v236
    %v238 = vmul.f32 %v233, %v237
    %vm239 = vweird.f32 %v222
    %vm240 = vweird.f32 %v233
    %vm241 = vmor %vm239, %vm240
    %v242 = vsel %vm241, %v233, %v238
    %v243 = vmul.f32 %v211, %v232
    %v244 = vmul.f32 %v212, %v242
    %v246 = vperm.slane %v196, 0
    %v248 = vmul.f32 %v243, %v246
    %v249 = vmul.f32 %v244, %v246
    %v251 = vperm.slane %v197, 0
    %v253 = vadd.f32 %v248, %v251
    %v254 = vadd.f32 %v249, %v251
    %v255 = vpack.c.bf16 %v254, %v253
    %v256 = vld [vmem:[#allocation8] sm:$0xf]
    %v257 = vld [vmem:[#allocation8 + $0x4] sm:$0xf]
    %v258 = vld [vmem:[#allocation8 + $0x8] sm:$0xf]
    %v259 = vld [vmem:[#allocation8 + $0xc] sm:$0xf]
    %v260 = vld [vmem:[#allocation8 + $0x10] sm:$0xf]
    %v261 = vld [vmem:[#allocation8 + $0x14] sm:$0xf]
    %v262 = vld [vmem:[#allocation8 + $0x18] sm:$0xf]
    %v263 = vld [vmem:[#allocation8 + $0x1c] sm:$0xf]
    %v264 = vld [vmem:[#allocation8 + $0x20] sm:$0xf]
    %v265 = vld [vmem:[#allocation8 + $0x24] sm:$0xf]
    %v266 = vld [vmem:[#allocation8 + $0x28] sm:$0xf]
    %v267 = vld [vmem:[#allocation8 + $0x2c] sm:$0xf]
    %v268 = vld [vmem:[#allocation8 + $0x30] sm:$0xf]
    %v269 = vld [vmem:[#allocation8 + $0x34] sm:$0xf]
    %v270 = vld [vmem:[#allocation8 + $0x38] sm:$0xf]
    %v271 = vld [vmem:[#allocation8 + $0x3c] sm:$0xf]
    %v272 = vld [vmem:[%s4] sm:$0x1]
    %v274 = vperm.slane %v272, 0
    %v292 = vunpack.c.l.b16 %v256
    %v293 = vunpack.c.l.b16 %v257
    %v294 = vunpack.c.l.b16 %v258
    %v295 = vunpack.c.l.b16 %v259
    %v296 = vunpack.c.l.b16 %v260
    %v297 = vunpack.c.l.b16 %v261
    %v298 = vunpack.c.l.b16 %v262
    %v299 = vunpack.c.l.b16 %v263
    %v300 = vunpack.c.l.b16 %v264
    %v301 = vunpack.c.l.b16 %v265
    %v302 = vunpack.c.l.b16 %v266
    %v303 = vunpack.c.l.b16 %v267
    %v304 = vunpack.c.l.b16 %v268
    %v305 = vunpack.c.l.b16 %v269
    %v306 = vunpack.c.l.b16 %v270
    %v307 = vunpack.c.l.b16 %v271
    %v308 = vpack.c.b16 %v293, %v292
    %v309 = vpack.c.b16 %v295, %v294
    %v310 = vpack.c.b16 %v297, %v296
    %v311 = vpack.c.b16 %v299, %v298
    %v312 = vpack.c.b16 %v301, %v300
    %v313 = vpack.c.b16 %v303, %v302
    %v314 = vpack.c.b16 %v305, %v304
    %v315 = vpack.c.b16 %v307, %v306
    %324 = vmatpush.bf16.msra.mxu0 %v315
    %325 = vmatpush.bf16.msra.mxu0 %v314
    %326 = vmatpush.bf16.msra.mxu0 %v313
    %327 = vmatpush.bf16.msra.mxu0 %v312
    %328 = vmatpush.bf16.msra.mxu0 %v311
    %329 = vmatpush.bf16.msra.mxu0 %v310
    %330 = vmatpush.bf16.msra.mxu0 %v309
    %331 = vmatpush.bf16.msra.mxu0 %v308
    %332 = vmatmul.bf16.gmra.mxu0 %v255
    %v333 = vpop.f32.mrf.mxu0
    %v334 = vadd.f32 %v274, %v333
    %v335 = vpop.f32.mrf.mxu0
    %v336 = vadd.f32 %v274, %v335
    %337 = vdwg.mxu0
    %v338 = vld [vmem:[#allocation9] sm:$0xf]
    %v339 = vld [vmem:[#allocation9 + $0x4] sm:$0xf]
    %v340 = vld [vmem:[#allocation9 + $0x8] sm:$0xf]
    %v341 = vld [vmem:[#allocation9 + $0xc] sm:$0xf]
    %v342 = vld [vmem:[#allocation9 + $0x10] sm:$0xf]
    %v343 = vld [vmem:[#allocation9 + $0x14] sm:$0xf]
    %v344 = vld [vmem:[#allocation9 + $0x18] sm:$0xf]
    %v345 = vld [vmem:[#allocation9 + $0x1c] sm:$0xf]
    %v346 = vld [vmem:[#allocation9 + $0x20] sm:$0xf]
    %v347 = vld [vmem:[#allocation9 + $0x24] sm:$0xf]
    %v348 = vld [vmem:[#allocation9 + $0x28] sm:$0xf]
    %v349 = vld [vmem:[#allocation9 + $0x2c] sm:$0xf]
    %v350 = vld [vmem:[#allocation9 + $0x30] sm:$0xf]
    %v351 = vld [vmem:[#allocation9 + $0x34] sm:$0xf]
    %v352 = vld [vmem:[#allocation9 + $0x38] sm:$0xf]
    %v353 = vld [vmem:[#allocation9 + $0x3c] sm:$0xf]
    %v354 = vld [vmem:[%s6] sm:$0x1]
    %v356 = vperm.slane %v354, 0
    %v374 = vunpack.c.l.b16 %v338
    %v375 = vunpack.c.l.b16 %v339
    %v376 = vunpack.c.l.b16 %v340
    %v377 = vunpack.c.l.b16 %v341
    %v378 = vunpack.c.l.b16 %v342
    %v379 = vunpack.c.l.b16 %v343
    %v380 = vunpack.c.l.b16 %v344
    %v381 = vunpack.c.l.b16 %v345
    %v382 = vunpack.c.l.b16 %v346
    %v383 = vunpack.c.l.b16 %v347
    %v384 = vunpack.c.l.b16 %v348
    %v385 = vunpack.c.l.b16 %v349
    %v386 = vunpack.c.l.b16 %v350
    %v387 = vunpack.c.l.b16 %v351
    %v388 = vunpack.c.l.b16 %v352
    %v389 = vunpack.c.l.b16 %v353
    %v390 = vpack.c.b16 %v375, %v374
    %v391 = vpack.c.b16 %v377, %v376
    %v392 = vpack.c.b16 %v379, %v378
    %v393 = vpack.c.b16 %v381, %v380
    %v394 = vpack.c.b16 %v383, %v382
    %v395 = vpack.c.b16 %v385, %v384
    %v396 = vpack.c.b16 %v387, %v386
    %v397 = vpack.c.b16 %v389, %v388
    %406 = vmatpush.bf16.msra.mxu0 %v397
    %407 = vmatpush.bf16.msra.mxu0 %v396
    %408 = vmatpush.bf16.msra.mxu0 %v395
    %409 = vmatpush.bf16.msra.mxu0 %v394
    %410 = vmatpush.bf16.msra.mxu0 %v393
    %411 = vmatpush.bf16.msra.mxu0 %v392
    %412 = vmatpush.bf16.msra.mxu0 %v391
    %413 = vmatpush.bf16.msra.mxu0 %v390
    %414 = vmatmul.bf16.gmra.mxu0 %v255
    %v415 = vpop.f32.mrf.mxu0
    %v416 = vadd.f32 %v356, %v415
    %v417 = vpop.f32.mrf.mxu0
    %v418 = vadd.f32 %v356, %v417
    %419 = vdwg.mxu0
    %v420 = vld [vmem:[#allocation11] sm:$0xf]
    %v421 = vld [vmem:[#allocation11 + $0x4] sm:$0xf]
    %v422 = vld [vmem:[#allocation11 + $0x8] sm:$0xf]
    %v423 = vld [vmem:[#allocation11 + $0xc] sm:$0xf]
    %v424 = vld [vmem:[#allocation11 + $0x10] sm:$0xf]
    %v425 = vld [vmem:[#allocation11 + $0x14] sm:$0xf]
    %v426 = vld [vmem:[#allocation11 + $0x18] sm:$0xf]
    %v427 = vld [vmem:[#allocation11 + $0x1c] sm:$0xf]
    %v428 = vld [vmem:[#allocation11 + $0x20] sm:$0xf]
    %v429 = vld [vmem:[#allocation11 + $0x24] sm:$0xf]
    %v430 = vld [vmem:[#allocation11 + $0x28] sm:$0xf]
    %v431 = vld [vmem:[#allocation11 + $0x2c] sm:$0xf]
    %v432 = vld [vmem:[#allocation11 + $0x30] sm:$0xf]
    %v433 = vld [vmem:[#allocation11 + $0x34] sm:$0xf]
    %v434 = vld [vmem:[#allocation11 + $0x38] sm:$0xf]
    %v435 = vld [vmem:[#allocation11 + $0x3c] sm:$0xf]
    %v436 = vld [vmem:[#allocation12] sm:$0x1]
    %v438 = vperm.slane %v436, 0
    %v456 = vunpack.c.l.b16 %v420
    %v457 = vunpack.c.l.b16 %v421
    %v458 = vunpack.c.l.b16 %v422
    %v459 = vunpack.c.l.b16 %v423
    %v460 = vunpack.c.l.b16 %v424
    %v461 = vunpack.c.l.b16 %v425
    %v462 = vunpack.c.l.b16 %v426
    %v463 = vunpack.c.l.b16 %v427
    %v464 = vunpack.c.l.b16 %v428
    %v465 = vunpack.c.l.b16 %v429
    %v466 = vunpack.c.l.b16 %v430
    %v467 = vunpack.c.l.b16 %v431
    %v468 = vunpack.c.l.b16 %v432
    %v469 = vunpack.c.l.b16 %v433
    %v470 = vunpack.c.l.b16 %v434
    %v471 = vunpack.c.l.b16 %v435
    %v472 = vpack.c.b16 %v457, %v456
    %v473 = vpack.c.b16 %v459, %v458
    %v474 = vpack.c.b16 %v461, %v460
    %v475 = vpack.c.b16 %v463, %v462
    %v476 = vpack.c.b16 %v465, %v464
    %v477 = vpack.c.b16 %v467, %v466
    %v478 = vpack.c.b16 %v469, %v468
    %v479 = vpack.c.b16 %v471, %v470
    %488 = vmatpush.bf16.msra.mxu0 %v479
    %489 = vmatpush.bf16.msra.mxu0 %v478
    %490 = vmatpush.bf16.msra.mxu0 %v477
    %491 = vmatpush.bf16.msra.mxu0 %v476
    %492 = vmatpush.bf16.msra.mxu0 %v475
    %493 = vmatpush.bf16.msra.mxu0 %v474
    %494 = vmatpush.bf16.msra.mxu0 %v473
    %495 = vmatpush.bf16.msra.mxu0 %v472
    %496 = vmatmul.bf16.gmra.mxu0 %v255
    %v497 = vpop.f32.mrf.mxu0
    %v498 = vadd.f32 %v438, %v497
    %v499 = vpop.f32.mrf.mxu0
    %v500 = vadd.f32 %v438, %v499
    %501 = vdwg.mxu0
    %v502 = vmul.f32 %v334, 0.17677669
    %v503 = vmul.f32 %v336, 0.17677669
    %v504 = vlaneseq
    %v505 = vshrl.u32 %v504, 7
    %v506 = vlaneseq
    %v507 = vand.u32 %v506, 127
    %vm508 = vcmp.gt.s32.totalorder %v507, %v505
    %v509 = vsel %vm508, -inf, 0.0
    %v510 = vpack.c.bf16 %v502, %v502
    %v511 = vpack.c.bf16 %v503, %v503
    %v512 = vpack.c.bf16 %v416, %v416
    %v513 = vpack.c.bf16 %v418, %v418
    %v514 = vpack.c.bf16 %v498, %v498
    %v515 = vpack.c.bf16 %v500, %v500
    %vm516 = vcmask 261120
    %v518 = vsel %vm516, %v510, 0
    %v521 = vsel %vm516, %v512, 0
    %523 = vmatpush.bf16.xpose.msra.mxu0 0
    %524 = vmatpush.bf16.xpose.msra.mxu0 0
    %525 = vmatpush.bf16.xpose.msra.mxu0 0
    %526 = vmatpush.bf16.xpose.msra.mxu0 0
    %527 = vmatpush.bf16.xpose.msra.mxu0 0
    %528 = vmatpush.bf16.xpose.msra.mxu0 0
    %529 = vmatpush.bf16.xpose.msra.mxu0 0
    %530 = vmatpush.bf16.xpose.msra.mxu0 %v521
    %531 = vmatmul.bf16.gmra.mxu0 %v518
    %v532 = vpop.f32.mrf.mxu0
    %v533 = vadd.f32 %v509, %v532
    %v534 = vpop.f32.mrf.mxu0
    %535 = vdwg.mxu0
    %vm536 = vcmask 64512
    %v537 = vsel %vm536, %v533, -inf
    %538 = vmax.xlane.f32.xlu0 %v537
    %v539 = vpop.xlane.xlu0 %538
    %v540 = vsub.f32 %v533, %v539
    %v541 = vmul.f32 %v540, 1.442695
    %v542 = vpow.pop %v541
    %v543 = vsel %vm536, %v542, 0.0
    %544 = vadd.xlane.f32.xlu0 %v543
    %v545 = vpop.xlane.xlu0 %544
    %v546 = vrcp.pop %v545
    %v547 = vmul.f32 %v542, %v546
    %v548 = vpack.c.bf16 %v547, %v547
    %v550 = vsel %vm536, %v548, 0
    %vm552 = vcmask 1043456
    %v554 = vsel %vm552, %v514, 0
    %556 = vmatpush.bf16.msra.mxu0 0
    %557 = vmatpush.bf16.msra.mxu0 0
    %558 = vmatpush.bf16.msra.mxu0 0
    %559 = vmatpush.bf16.msra.mxu0 0
    %560 = vmatpush.bf16.msra.mxu0 0
    %561 = vmatpush.bf16.msra.mxu0 0
    %562 = vmatpush.bf16.msra.mxu0 0
    %563 = vmatpush.bf16.msra.mxu0 %v554
    %564 = vmatmul.bf16.gmra.mxu0 %v550
    %v565 = vpop.f32.mrf.mxu0
    %v566 = vadd.f32 0.0, %v565
    %v567 = vpop.f32.mrf.mxu0
    %568 = vdwg.mxu0
    %v569 = vpack.c.bf16 %v566, %v566
    %vm570 = vcmask 257024
    %571 = vst.msk [vmem:[#allocation2] sm:$0xf] %vm570, %v569
    %v573 = vunpack.c.l.b16 %v510
    %v574 = vpack.c.b16 %v573, %v573
    %575 = vrot.lane.b32.xlu0 %v574, 96
    %v576 = vpop.permute.xlu0 %575
    %v578 = vunpack.c.l.b16 %v512
    %v579 = vpack.c.b16 %v578, %v578
    %580 = vrot.lane.b32.xlu0 %v579, 96
    %v581 = vpop.permute.xlu0 %580
    %v583 = vsel %vm516, %v576, 0
    %v586 = vsel %vm516, %v581, 0
    %588 = vmatpush.bf16.xpose.msra.mxu0 0
    %589 = vmatpush.bf16.xpose.msra.mxu0 0
    %590 = vmatpush.bf16.xpose.msra.mxu0 0
    %591 = vmatpush.bf16.xpose.msra.mxu0 0
    %592 = vmatpush.bf16.xpose.msra.mxu0 0
    %593 = vmatpush.bf16.xpose.msra.mxu0 0
    %594 = vmatpush.bf16.xpose.msra.mxu0 0
    %595 = vmatpush.bf16.xpose.msra.mxu0 %v586
    %596 = vmatmul.bf16.gmra.mxu0 %v583
    %v597 = vpop.f32.mrf.mxu0
    %v598 = vadd.f32 %v509, %v597
    %v599 = vpop.f32.mrf.mxu0
    %600 = vdwg.mxu0
    %v601 = vsel %vm536, %v598, -inf
    %602 = vmax.xlane.f32.xlu0 %v601
    %v603 = vpop.xlane.xlu0 %602
    %v604 = vsub.f32 %v598, %v603
    %v605 = vmul.f32 %v604, 1.442695
    %v606 = vpow.pop %v605
    %v607 = vsel %vm536, %v606, 0.0
    %608 = vadd.xlane.f32.xlu0 %v607
    %v609 = vpop.xlane.xlu0 %608
    %v610 = vrcp.pop %v609
    %v611 = vmul.f32 %v606, %v610
    %v612 = vpack.c.bf16 %v611, %v611
    %v614 = vunpack.c.l.b16 %v514
    %v615 = vpack.c.b16 %v614, %v614
    %616 = vrot.lane.b32.xlu0 %v615, 96
    %v617 = vpop.permute.xlu0 %616
    %v619 = vsel %vm536, %v612, 0
    %v622 = vsel %vm552, %v617, 0
    %624 = vmatpush.bf16.msra.mxu0 0
    %625 = vmatpush.bf16.msra.mxu0 0
    %626 = vmatpush.bf16.msra.mxu0 0
    %627 = vmatpush.bf16.msra.mxu0 0
    %628 = vmatpush.bf16.msra.mxu0 0
    %629 = vmatpush.bf16.msra.mxu0 0
    %630 = vmatpush.bf16.msra.mxu0 0
    %631 = vmatpush.bf16.msra.mxu0 %v622
    %632 = vmatmul.bf16.gmra.mxu0 %v619
    %v633 = vpop.f32.mrf.mxu0
    %v634 = vadd.f32 0.0, %v633
    %v635 = vpop.f32.mrf.mxu0
    %636 = vdwg.mxu0
    %v637 = vpack.c.bf16 %v634, %v634
    %639 = vrot.lane.b32.xlu0 %v637, 32
    %v640 = vpop.permute.xlu0 %639
    %vm642 = vcmask 519424
    %643 = vst.msk [vmem:[#allocation2] sm:$0xf] %vm642, %v640
    %644 = vrot.lane.b32.xlu0 %v574, 64
    %v645 = vpop.permute.xlu0 %644
    %646 = vrot.lane.b32.xlu0 %v579, 64
    %v647 = vpop.permute.xlu0 %646
    %v649 = vsel %vm516, %v645, 0
    %v652 = vsel %vm516, %v647, 0
    %654 = vmatpush.bf16.xpose.msra.mxu0 0
    %655 = vmatpush.bf16.xpose.msra.mxu0 0
    %656 = vmatpush.bf16.xpose.msra.mxu0 0
    %657 = vmatpush.bf16.xpose.msra.mxu0 0
    %658 = vmatpush.bf16.xpose.msra.mxu0 0
    %659 = vmatpush.bf16.xpose.msra.mxu0 0
    %660 = vmatpush.bf16.xpose.msra.mxu0 0
    %661 = vmatpush.bf16.xpose.msra.mxu0 %v652
    %662 = vmatmul.bf16.gmra.mxu0 %v649
    %v663 = vpop.f32.mrf.mxu0
    %v664 = vadd.f32 %v509, %v663
    %v665 = vpop.f32.mrf.mxu0
    %666 = vdwg.mxu0
    %v667 = vsel %vm536, %v664, -inf
    %668 = vmax.xlane.f32.xlu0 %v667
    %v669 = vpop.xlane.xlu0 %668
    %v670 = vsub.f32 %v664, %v669
    %v671 = vmul.f32 %v670, 1.442695
    %v672 = vpow.pop %v671
    %v673 = vsel %vm536, %v672, 0.0
    %674 = vadd.xlane.f32.xlu0 %v673
    %v675 = vpop.xlane.xlu0 %674
    %v676 = vrcp.pop %v675
    %v677 = vmul.f32 %v672, %v676
    %v678 = vpack.c.bf16 %v677, %v677
    %679 = vrot.lane.b32.xlu0 %v615, 64
    %v680 = vpop.permute.xlu0 %679
    %v682 = vsel %vm536, %v678, 0
    %v685 = vsel %vm552, %v680, 0
    %687 = vmatpush.bf16.msra.mxu0 0
    %688 = vmatpush.bf16.msra.mxu0 0
    %689 = vmatpush.bf16.msra.mxu0 0
    %690 = vmatpush.bf16.msra.mxu0 0
    %691 = vmatpush.bf16.msra.mxu0 0
    %692 = vmatpush.bf16.msra.mxu0 0
    %693 = vmatpush.bf16.msra.mxu0 0
    %694 = vmatpush.bf16.msra.mxu0 %v685
    %695 = vmatmul.bf16.gmra.mxu0 %v682
    %v696 = vpop.f32.mrf.mxu0
    %v697 = vadd.f32 0.0, %v696
    %v698 = vpop.f32.mrf.mxu0
    %699 = vdwg.mxu0
    %v700 = vpack.c.bf16 %v697, %v697
    %702 = vrot.lane.b32.xlu0 %v700, 64
    %v703 = vpop.permute.xlu0 %702
    %vm705 = vcmask 781824
    %706 = vst.msk [vmem:[#allocation2] sm:$0xf] %vm705, %v703
    %707 = vrot.lane.b32.xlu0 %v574, 32
    %v708 = vpop.permute.xlu0 %707
    %709 = vrot.lane.b32.xlu0 %v579, 32
    %v710 = vpop.permute.xlu0 %709
    %v712 = vsel %vm516, %v708, 0
    %v715 = vsel %vm516, %v710, 0
    %717 = vmatpush.bf16.xpose.msra.mxu0 0
    %718 = vmatpush.bf16.xpose.msra.mxu0 0
    %719 = vmatpush.bf16.xpose.msra.mxu0 0
    %720 = vmatpush.bf16.xpose.msra.mxu0 0
    %721 = vmatpush.bf16.xpose.msra.mxu0 0
    %722 = vmatpush.bf16.xpose.msra.mxu0 0
    %723 = vmatpush.bf16.xpose.msra.mxu0 0
    %724 = vmatpush.bf16.xpose.msra.mxu0 %v715
    %725 = vmatmul.bf16.gmra.mxu0 %v712
    %v726 = vpop.f32.mrf.mxu0
    %v727 = vadd.f32 %v509, %v726
    %v728 = vpop.f32.mrf.mxu0
    %729 = vdwg.mxu0
    %v730 = vsel %vm536, %v727, -inf
    %731 = vmax.xlane.f32.xlu0 %v730
    %v732 = vpop.xlane.xlu0 %731
    %v733 = vsub.f32 %v727, %v732
    %v734 = vmul.f32 %v733, 1.442695
    %v735 = vpow.pop %v734
    %v736 = vsel %vm536, %v735, 0.0
    %737 = vadd.xlane.f32.xlu0 %v736
    %v738 = vpop.xlane.xlu0 %737
    %v739 = vrcp.pop %v738
    %v740 = vmul.f32 %v735, %v739
    %v741 = vpack.c.bf16 %v740, %v740
    %742 = vrot.lane.b32.xlu0 %v615, 32
    %v743 = vpop.permute.xlu0 %742
    %v745 = vsel %vm536, %v741, 0
    %v748 = vsel %vm552, %v743, 0
    %750 = vmatpush.bf16.msra.mxu0 0
    %751 = vmatpush.bf16.msra.mxu0 0
    %752 = vmatpush.bf16.msra.mxu0 0
    %753 = vmatpush.bf16.msra.mxu0 0
    %754 = vmatpush.bf16.msra.mxu0 0
    %755 = vmatpush.bf16.msra.mxu0 0
    %756 = vmatpush.bf16.msra.mxu0 0
    %757 = vmatpush.bf16.msra.mxu0 %v748
    %758 = vmatmul.bf16.gmra.mxu0 %v745
    %v759 = vpop.f32.mrf.mxu0
    %v760 = vadd.f32 0.0, %v759
    %v761 = vpop.f32.mrf.mxu0
    %762 = vdwg.mxu0
    %v763 = vpack.c.bf16 %v760, %v760
    %765 = vrot.lane.b32.xlu0 %v763, 96
    %v766 = vpop.permute.xlu0 %765
    %vm768 = vcmask 1044224
    %769 = vst.msk [vmem:[#allocation2] sm:$0xf] %vm768, %v766
    %v771 = vsel %vm516, %v511, 0
    %v774 = vsel %vm516, %v513, 0
    %776 = vmatpush.bf16.xpose.msra.mxu0 0
    %777 = vmatpush.bf16.xpose.msra.mxu0 0
    %778 = vmatpush.bf16.xpose.msra.mxu0 0
    %779 = vmatpush.bf16.xpose.msra.mxu0 0
    %780 = vmatpush.bf16.xpose.msra.mxu0 0
    %781 = vmatpush.bf16.xpose.msra.mxu0 0
    %782 = vmatpush.bf16.xpose.msra.mxu0 0
    %783 = vmatpush.bf16.xpose.msra.mxu0 %v774
    %784 = vmatmul.bf16.gmra.mxu0 %v771
    %v785 = vpop.f32.mrf.mxu0
    %v786 = vadd.f32 %v509, %v785
    %v787 = vpop.f32.mrf.mxu0
    %788 = vdwg.mxu0
    %v789 = vsel %vm536, %v786, -inf
    %790 = vmax.xlane.f32.xlu0 %v789
    %v791 = vpop.xlane.xlu0 %790
    %v792 = vsub.f32 %v786, %v791
    %v793 = vmul.f32 %v792, 1.442695
    %v794 = vpow.pop %v793
    %v795 = vsel %vm536, %v794, 0.0
    %796 = vadd.xlane.f32.xlu0 %v795
    %v797 = vpop.xlane.xlu0 %796
    %v798 = vrcp.pop %v797
    %v799 = vmul.f32 %v794, %v798
    %v800 = vpack.c.bf16 %v799, %v799
    %v802 = vsel %vm536, %v800, 0
    %v805 = vsel %vm552, %v515, 0
    %807 = vmatpush.bf16.msra.mxu0 0
    %808 = vmatpush.bf16.msra.mxu0 0
    %809 = vmatpush.bf16.msra.mxu0 0
    %810 = vmatpush.bf16.msra.mxu0 0
    %811 = vmatpush.bf16.msra.mxu0 0
    %812 = vmatpush.bf16.msra.mxu0 0
    %813 = vmatpush.bf16.msra.mxu0 0
    %814 = vmatpush.bf16.msra.mxu0 %v805
    %815 = vmatmul.bf16.gmra.mxu0 %v802
    %v816 = vpop.f32.mrf.mxu0
    %v817 = vadd.f32 0.0, %v816
    %v818 = vpop.f32.mrf.mxu0
    %819 = vdwg.mxu0
    %v820 = vpack.c.bf16 %v817, %v817
    %821 = vst.msk [vmem:[#allocation2 + $0x4] sm:$0xf] %vm570, %v820
    %v823 = vunpack.c.l.b16 %v511
    %v824 = vpack.c.b16 %v823, %v823
    %825 = vrot.lane.b32.xlu0 %v824, 96
    %v826 = vpop.permute.xlu0 %825
    %v828 = vunpack.c.l.b16 %v513
    %v829 = vpack.c.b16 %v828, %v828
    %830 = vrot.lane.b32.xlu0 %v829, 96
    %v831 = vpop.permute.xlu0 %830
    %v833 = vsel %vm516, %v826, 0
    %v836 = vsel %vm516, %v831, 0
    %838 = vmatpush.bf16.xpose.msra.mxu0 0
    %839 = vmatpush.bf16.xpose.msra.mxu0 0
    %840 = vmatpush.bf16.xpose.msra.mxu0 0
    %841 = vmatpush.bf16.xpose.msra.mxu0 0
    %842 = vmatpush.bf16.xpose.msra.mxu0 0
    %843 = vmatpush.bf16.xpose.msra.mxu0 0
    %844 = vmatpush.bf16.xpose.msra.mxu0 0
    %845 = vmatpush.bf16.xpose.msra.mxu0 %v836
    %846 = vmatmul.bf16.gmra.mxu0 %v833
    %v847 = vpop.f32.mrf.mxu0
    %v848 = vadd.f32 %v509, %v847
    %v849 = vpop.f32.mrf.mxu0
    %850 = vdwg.mxu0
    %v851 = vsel %vm536, %v848, -inf
    %852 = vmax.xlane.f32.xlu0 %v851
    %v853 = vpop.xlane.xlu0 %852
    %v854 = vsub.f32 %v848, %v853
    %v855 = vmul.f32 %v854, 1.442695
    %v856 = vpow.pop %v855
    %v857 = vsel %vm536, %v856, 0.0
    %858 = vadd.xlane.f32.xlu0 %v857
    %v859 = vpop.xlane.xlu0 %858
    %v860 = vrcp.pop %v859
    %v861 = vmul.f32 %v856, %v860
    %v862 = vpack.c.bf16 %v861, %v861
    %v864 = vunpack.c.l.b16 %v515
    %v865 = vpack.c.b16 %v864, %v864
    %866 = vrot.lane.b32.xlu0 %v865, 96
    %v867 = vpop.permute.xlu0 %866
    %v869 = vsel %vm536, %v862, 0
    %v872 = vsel %vm552, %v867, 0
    %874 = vmatpush.bf16.msra.mxu0 0
    %875 = vmatpush.bf16.msra.mxu0 0
    %876 = vmatpush.bf16.msra.mxu0 0
    %877 = vmatpush.bf16.msra.mxu0 0
    %878 = vmatpush.bf16.msra.mxu0 0
    %879 = vmatpush.bf16.msra.mxu0 0
    %880 = vmatpush.bf16.msra.mxu0 0
    %881 = vmatpush.bf16.msra.mxu0 %v872
    %882 = vmatmul.bf16.gmra.mxu0 %v869
    %v883 = vpop.f32.mrf.mxu0
    %v884 = vadd.f32 0.0, %v883
    %v885 = vpop.f32.mrf.mxu0
    %886 = vdwg.mxu0
    %v887 = vpack.c.bf16 %v884, %v884
    %889 = vrot.lane.b32.xlu0 %v887, 32
    %v890 = vpop.permute.xlu0 %889
    %892 = vst.msk [vmem:[#allocation2 + $0x4] sm:$0xf] %vm642, %v890
    %893 = vrot.lane.b32.xlu0 %v824, 64
    %v894 = vpop.permute.xlu0 %893
    %895 = vrot.lane.b32.xlu0 %v829, 64
    %v896 = vpop.permute.xlu0 %895
    %v898 = vsel %vm516, %v894, 0
    %v901 = vsel %vm516, %v896, 0
    %903 = vmatpush.bf16.xpose.msra.mxu0 0
    %904 = vmatpush.bf16.xpose.msra.mxu0 0
    %905 = vmatpush.bf16.xpose.msra.mxu0 0
    %906 = vmatpush.bf16.xpose.msra.mxu0 0
    %907 = vmatpush.bf16.xpose.msra.mxu0 0
    %908 = vmatpush.bf16.xpose.msra.mxu0 0
    %909 = vmatpush.bf16.xpose.msra.mxu0 0
    %910 = vmatpush.bf16.xpose.msra.mxu0 %v901
    %911 = vmatmul.bf16.gmra.mxu0 %v898
    %v912 = vpop.f32.mrf.mxu0
    %v913 = vadd.f32 %v509, %v912
    %v914 = vpop.f32.mrf.mxu0
    %915 = vdwg.mxu0
    %v916 = vsel %vm536, %v913, -inf
    %917 = vmax.xlane.f32.xlu0 %v916
    %v918 = vpop.xlane.xlu0 %917
    %v919 = vsub.f32 %v913, %v918
    %v920 = vmul.f32 %v919, 1.442695
    %v921 = vpow.pop %v920
    %v922 = vsel %vm536, %v921, 0.0
    %923 = vadd.xlane.f32.xlu0 %v922
    %v924 = vpop.xlane.xlu0 %923
    %v925 = vrcp.pop %v924
    %v926 = vmul.f32 %v921, %v925
    %v927 = vpack.c.bf16 %v926, %v926
    %928 = vrot.lane.b32.xlu0 %v865, 64
    %v929 = vpop.permute.xlu0 %928
    %v931 = vsel %vm536, %v927, 0
    %v934 = vsel %vm552, %v929, 0
    %936 = vmatpush.bf16.msra.mxu0 0
    %937 = vmatpush.bf16.msra.mxu0 0
    %938 = vmatpush.bf16.msra.mxu0 0
    %939 = vmatpush.bf16.msra.mxu0 0
    %940 = vmatpush.bf16.msra.mxu0 0
    %941 = vmatpush.bf16.msra.mxu0 0
    %942 = vmatpush.bf16.msra.mxu0 0
    %943 = vmatpush.bf16.msra.mxu0 %v934
    %944 = vmatmul.bf16.gmra.mxu0 %v931
    %v945 = vpop.f32.mrf.mxu0
    %v946 = vadd.f32 0.0, %v945
    %v947 = vpop.f32.mrf.mxu0
    %948 = vdwg.mxu0
    %v949 = vpack.c.bf16 %v946, %v946
    %951 = vrot.lane.b32.xlu0 %v949, 64
    %v952 = vpop.permute.xlu0 %951
    %954 = vst.msk [vmem:[#allocation2 + $0x4] sm:$0xf] %vm705, %v952
    %955 = vrot.lane.b32.xlu0 %v824, 32
    %v956 = vpop.permute.xlu0 %955
    %957 = vrot.lane.b32.xlu0 %v829, 32
    %v958 = vpop.permute.xlu0 %957
    %v960 = vsel %vm516, %v956, 0
    %v963 = vsel %vm516, %v958, 0
    %965 = vmatpush.bf16.xpose.msra.mxu0 0
    %966 = vmatpush.bf16.xpose.msra.mxu0 0
    %967 = vmatpush.bf16.xpose.msra.mxu0 0
    %968 = vmatpush.bf16.xpose.msra.mxu0 0
    %969 = vmatpush.bf16.xpose.msra.mxu0 0
    %970 = vmatpush.bf16.xpose.msra.mxu0 0
    %971 = vmatpush.bf16.xpose.msra.mxu0 0
    %972 = vmatpush.bf16.xpose.msra.mxu0 %v963
    %973 = vmatmul.bf16.gmra.mxu0 %v960
    %v974 = vpop.f32.mrf.mxu0
    %v975 = vadd.f32 %v509, %v974
    %v976 = vpop.f32.mrf.mxu0
    %977 = vdwg.mxu0
    %v978 = vsel %vm536, %v975, -inf
    %979 = vmax.xlane.f32.xlu0 %v978
    %v980 = vpop.xlane.xlu0 %979
    %v981 = vsub.f32 %v975, %v980
    %v982 = vmul.f32 %v981, 1.442695
    %v983 = vpow.pop %v982
    %v984 = vsel %vm536, %v983, 0.0
    %985 = vadd.xlane.f32.xlu0 %v984
    %v986 = vpop.xlane.xlu0 %985
    %v987 = vrcp.pop %v986
    %v988 = vmul.f32 %v983, %v987
    %v989 = vpack.c.bf16 %v988, %v988
    %990 = vrot.lane.b32.xlu0 %v865, 32
    %v991 = vpop.permute.xlu0 %990
    %v993 = vsel %vm536, %v989, 0
    %v996 = vsel %vm552, %v991, 0
    %998 = vmatpush.bf16.msra.mxu0 0
    %999 = vmatpush.bf16.msra.mxu0 0
    %1000 = vmatpush.bf16.msra.mxu0 0
    %1001 = vmatpush.bf16.msra.mxu0 0
    %1002 = vmatpush.bf16.msra.mxu0 0
    %1003 = vmatpush.bf16.msra.mxu0 0
    %1004 = vmatpush.bf16.msra.mxu0 0
    %1005 = vmatpush.bf16.msra.mxu0 %v996
    %1006 = vmatmul.bf16.gmra.mxu0 %v993
    %v1007 = vpop.f32.mrf.mxu0
    %v1008 = vadd.f32 0.0, %v1007
    %v1009 = vpop.f32.mrf.mxu0
    %1010 = vdwg.mxu0
    %v1011 = vpack.c.bf16 %v1008, %v1008
    %1013 = vrot.lane.b32.xlu0 %v1011, 96
    %v1014 = vpop.permute.xlu0 %1013
    %1016 = vst.msk [vmem:[#allocation2 + $0x4] sm:$0xf] %vm768, %v1014
    %v1017 = vld [vmem:[#allocation2] sm:$0xf]
    %v1018 = vld [vmem:[#allocation2 + $0x4] sm:$0xf]
    %v1019 = vld [vmem:[#allocation14] sm:$0xf]
    %v1020 = vld [vmem:[#allocation14 + $0x4] sm:$0xf]
    %v1021 = vld [vmem:[#allocation14 + $0x8] sm:$0xf]
    %v1022 = vld [vmem:[#allocation14 + $0xc] sm:$0xf]
    %v1023 = vld [vmem:[#allocation14 + $0x10] sm:$0xf]
    %v1024 = vld [vmem:[#allocation14 + $0x14] sm:$0xf]
    %v1025 = vld [vmem:[#allocation14 + $0x18] sm:$0xf]
    %v1026 = vld [vmem:[#allocation14 + $0x1c] sm:$0xf]
    %v1027 = vld [vmem:[#allocation14 + $0x20] sm:$0xf]
    %v1028 = vld [vmem:[#allocation14 + $0x24] sm:$0xf]
    %v1029 = vld [vmem:[#allocation14 + $0x28] sm:$0xf]
    %v1030 = vld [vmem:[#allocation14 + $0x2c] sm:$0xf]
    %v1031 = vld [vmem:[#allocation14 + $0x30] sm:$0xf]
    %v1032 = vld [vmem:[#allocation14 + $0x34] sm:$0xf]
    %v1033 = vld [vmem:[#allocation14 + $0x38] sm:$0xf]
    %v1034 = vld [vmem:[#allocation14 + $0x3c] sm:$0xf]
    %v1035 = vld [vmem:[%s10] sm:$0x1]
    %v1037 = vperm.slane %v1035, 0
    %v1041 = vunpack.c.l.b16 %v1017
    %v1042 = vunpack.c.l.b16 %v1018
    %v1043 = vpack.c.b16 %v1042, %v1041
    %v1061 = vunpack.c.l.b16 %v1019
    %v1062 = vunpack.c.l.b16 %v1020
    %v1063 = vunpack.c.l.b16 %v1021
    %v1064 = vunpack.c.l.b16 %v1022
    %v1065 = vunpack.c.l.b16 %v1023
    %v1066 = vunpack.c.l.b16 %v1024
    %v1067 = vunpack.c.l.b16 %v1025
    %v1068 = vunpack.c.l.b16 %v1026
    %v1069 = vunpack.c.l.b16 %v1027
    %v1070 = vunpack.c.l.b16 %v1028
    %v1071 = vunpack.c.l.b16 %v1029
    %v1072 = vunpack.c.l.b16 %v1030
    %v1073 = vunpack.c.l.b16 %v1031
    %v1074 = vunpack.c.l.b16 %v1032
    %v1075 = vunpack.c.l.b16 %v1033
    %v1076 = vunpack.c.l.b16 %v1034
    %v1077 = vpack.c.b16 %v1062, %v1061
    %v1078 = vpack.c.b16 %v1064, %v1063
    %v1079 = vpack.c.b16 %v1066, %v1065
    %v1080 = vpack.c.b16 %v1068, %v1067
    %v1081 = vpack.c.b16 %v1070, %v1069
    %v1082 = vpack.c.b16 %v1072, %v1071
    %v1083 = vpack.c.b16 %v1074, %v1073
    %v1084 = vpack.c.b16 %v1076, %v1075
    %1093 = vmatpush.bf16.msra.mxu0 %v1084
    %1094 = vmatpush.bf16.msra.mxu0 %v1083
    %1095 = vmatpush.bf16.msra.mxu0 %v1082
    %1096 = vmatpush.bf16.msra.mxu0 %v1081
    %1097 = vmatpush.bf16.msra.mxu0 %v1080
    %1098 = vmatpush.bf16.msra.mxu0 %v1079
    %1099 = vmatpush.bf16.msra.mxu0 %v1078
    %1100 = vmatpush.bf16.msra.mxu0 %v1077
    %1101 = vmatmul.bf16.gmra.mxu0 %v1043
    %v1102 = vpop.f32.mrf.mxu0
    %v1103 = vadd.f32 %v1037, %v1102
    %v1104 = vpop.f32.mrf.mxu0
    %v1105 = vadd.f32 %v1037, %v1104
    %1106 = vdwg.mxu0
    %v1107 = vadd.f32 %v194, %v1103
    %v1108 = vadd.f32 %v195, %v1105
    %v1109 = vld [vmem:[%s11] sm:$0x1]
    %v1110 = vld [vmem:[%s12] sm:$0x1]
    %1111 = vadd.xlane.f32.xlu0 %v1107
    %v1112 = vpop.xlane.xlu0 %1111
    %1113 = vadd.xlane.f32.xlu0 %v1108
    %v1114 = vpop.xlane.xlu0 %1113
    %v1115 = vmul.f32 %v1112, %v208
    %v1116 = vmul.f32 %v1114, %v208
    %v1117 = vsub.f32 %v1107, %v1115
    %v1118 = vsub.f32 %v1108, %v1116
    %v1119 = vmul.f32 %v1117, %v1117
    %v1120 = vmul.f32 %v1118, %v1118
    %1121 = vadd.xlane.f32.xlu0 %v1119
    %v1122 = vpop.xlane.xlu0 %1121
    %1123 = vadd.xlane.f32.xlu0 %v1120
    %v1124 = vpop.xlane.xlu0 %1123
    %v1125 = vmul.f32 %v1122, %v208
    %v1126 = vmul.f32 %v1124, %v208
    %v1127 = vadd.f32 %v1125, 1e-05
    %v1128 = vadd.f32 %v1126, 1e-05
    %v1129 = vrsqrt.pop %v1127
    %v1130 = vmul.f32 %v1129, %v1127
    %v1131 = vmul.f32 %v1130, %v1129
    %v1132 = vmul.f32 0.5, %v1131
    %v1133 = vsub.f32 1.5, %v1132
    %v1134 = vmul.f32 %v1129, %v1133
    %vm1135 = vweird.f32 %v1127
    %vm1136 = vweird.f32 %v1129
    %vm1137 = vmor %vm1135, %vm1136
    %v1138 = vsel %vm1137, %v1129, %v1134
    %v1139 = vrsqrt.pop %v1128
    %v1140 = vmul.f32 %v1139, %v1128
    %v1141 = vmul.f32 %v1140, %v1139
    %v1142 = vmul.f32 0.5, %v1141
    %v1143 = vsub.f32 1.5, %v1142
    %v1144 = vmul.f32 %v1139, %v1143
    %vm1145 = vweird.f32 %v1128
    %vm1146 = vweird.f32 %v1139
    %vm1147 = vmor %vm1145, %vm1146
    %v1148 = vsel %vm1147, %v1139, %v1144
    %v1149 = vmul.f32 %v1117, %v1138
    %v1150 = vmul.f32 %v1118, %v1148
    %v1152 = vperm.slane %v1109, 0
    %v1154 = vmul.f32 %v1149, %v1152
    %v1155 = vmul.f32 %v1150, %v1152
    %v1157 = vperm.slane %v1110, 0
    %v1159 = vadd.f32 %v1154, %v1157
    %v1160 = vadd.f32 %v1155, %v1157
    %v1161 = vpack.c.bf16 %v1160, %v1159
    %v1162 = vld [vmem:[#allocation15] sm:$0xff]
    %v1163 = vld [vmem:[#allocation15 + $0x8] sm:$0xff]
    %v1164 = vld [vmem:[#allocation15 + $0x10] sm:$0xff]
    %v1165 = vld [vmem:[#allocation15 + $0x18] sm:$0xff]
    %v1166 = vld [vmem:[#allocation15 + $0x20] sm:$0xff]
    %v1167 = vld [vmem:[#allocation15 + $0x28] sm:$0xff]
    %v1168 = vld [vmem:[#allocation15 + $0x30] sm:$0xff]
    %v1169 = vld [vmem:[#allocation15 + $0x38] sm:$0xff]
    %v1170 = vld [vmem:[#allocation15 + $0x40] sm:$0xff]
    %v1171 = vld [vmem:[#allocation15 + $0x48] sm:$0xff]
    %v1172 = vld [vmem:[#allocation15 + $0x50] sm:$0xff]
    %v1173 = vld [vmem:[#allocation15 + $0x58] sm:$0xff]
    %v1174 = vld [vmem:[#allocation15 + $0x60] sm:$0xff]
    %v1175 = vld [vmem:[#allocation15 + $0x68] sm:$0xff]
    %v1176 = vld [vmem:[#allocation15 + $0x70] sm:$0xff]
    %v1177 = vld [vmem:[#allocation15 + $0x78] sm:$0xff]
    %v1178 = vld [vmem:[#allocation15 + $0x80] sm:$0xff]
    %v1179 = vld [vmem:[#allocation15 + $0x88] sm:$0xff]
    %v1180 = vld [vmem:[#allocation15 + $0x90] sm:$0xff]
    %v1181 = vld [vmem:[#allocation15 + $0x98] sm:$0xff]
    %v1182 = vld [vmem:[#allocation15 + $0xa0] sm:$0xff]
    %v1183 = vld [vmem:[#allocation15 + $0xa8] sm:$0xff]
    %v1184 = vld [vmem:[#allocation15 + $0xb0] sm:$0xff]
    %v1185 = vld [vmem:[#allocation15 + $0xb8] sm:$0xff]
    %v1186 = vld [vmem:[#allocation15 + $0xc0] sm:$0xff]
    %v1187 = vld [vmem:[#allocation15 + $0xc8] sm:$0xff]
    %v1188 = vld [vmem:[#allocation15 + $0xd0] sm:$0xff]
    %v1189 = vld [vmem:[#allocation15 + $0xd8] sm:$0xff]
    %v1190 = vld [vmem:[#allocation15 + $0xe0] sm:$0xff]
    %v1191 = vld [vmem:[#allocation15 + $0xe8] sm:$0xff]
    %v1192 = vld [vmem:[#allocation15 + $0xf0] sm:$0xff]
    %v1193 = vld [vmem:[#allocation15 + $0xf8] sm:$0xff]
    %v1194 = vld [vmem:[%s14] sm:$0xf]
    %v1196 = vperm.slane %v1194, 0
    %v1197 = vperm.slane %v1194, 1
    %v1198 = vperm.slane %v1194, 2
    %v1199 = vperm.slane %v1194, 3
    %v1236 = vunpack.c.l.b16 %v1162
    %v1237 = vunpack.c.h.b16 %v1162
    %v1238 = vunpack.c.l.b16 %v1163
    %v1239 = vunpack.c.h.b16 %v1163
    %v1240 = vunpack.c.l.b16 %v1164
    %v1241 = vunpack.c.h.b16 %v1164
    %v1242 = vunpack.c.l.b16 %v1165
    %v1243 = vunpack.c.h.b16 %v1165
    %v1244 = vunpack.c.l.b16 %v1166
    %v1245 = vunpack.c.h.b16 %v1166
    %v1246 = vunpack.c.l.b16 %v1167
    %v1247 = vunpack.c.h.b16 %v1167
    %v1248 = vunpack.c.l.b16 %v1168
    %v1249 = vunpack.c.h.b16 %v1168
    %v1250 = vunpack.c.l.b16 %v1169
    %v1251 = vunpack.c.h.b16 %v1169
    %v1252 = vunpack.c.l.b16 %v1170
    %v1253 = vunpack.c.h.b16 %v1170
    %v1254 = vunpack.c.l.b16 %v1171
    %v1255 = vunpack.c.h.b16 %v1171
    %v1256 = vunpack.c.l.b16 %v1172
    %v1257 = vunpack.c.h.b16 %v1172
    %v1258 = vunpack.c.l.b16 %v1173
    %v1259 = vunpack.c.h.b16 %v1173
    %v1260 = vunpack.c.l.b16 %v1174
    %v1261 = vunpack.c.h.b16 %v1174
    %v1262 = vunpack.c.l.b16 %v1175
    %v1263 = vunpack.c.h.b16 %v1175
    %v1264 = vunpack.c.l.b16 %v1176
    %v1265 = vunpack.c.h.b16 %v1176
    %v1266 = vunpack.c.l.b16 %v1177
    %v1267 = vunpack.c.h.b16 %v1177
    %v1268 = vunpack.c.l.b16 %v1178
    %v1269 = vunpack.c.h.b16 %v1178
    %v1270 = vunpack.c.l.b16 %v1179
    %v1271 = vunpack.c.h.b16 %v1179
    %v1272 = vunpack.c.l.b16 %v1180
    %v1273 = vunpack.c.h.b16 %v1180
    %v1274 = vunpack.c.l.b16 %v1181
    %v1275 = vunpack.c.h.b16 %v1181
    %v1276 = vunpack.c.l.b16 %v1182
    %v1277 = vunpack.c.h.b16 %v1182
    %v1278 = vunpack.c.l.b16 %v1183
    %v1279 = vunpack.c.h.b16 %v1183
    %v1280 = vunpack.c.l.b16 %v1184
    %v1281 = vunpack.c.h.b16 %v1184
    %v1282 = vunpack.c.l.b16 %v1185
    %v1283 = vunpack.c.h.b16 %v1185
    %v1284 = vunpack.c.l.b16 %v1186
    %v1285 = vunpack.c.h.b16 %v1186
    %v1286 = vunpack.c.l.b16 %v1187
    %v1287 = vunpack.c.h.b16 %v1187
    %v1288 = vunpack.c.l.b16 %v1188
    %v1289 = vunpack.c.h.b16 %v1188
    %v1290 = vunpack.c.l.b16 %v1189
    %v1291 = vunpack.c.h.b16 %v1189
    %v1292 = vunpack.c.l.b16 %v1190
    %v1293 = vunpack.c.h.b16 %v1190
    %v1294 = vunpack.c.l.b16 %v1191
    %v1295 = vunpack.c.h.b16 %v1191
    %v1296 = vunpack.c.l.b16 %v1192
    %v1297 = vunpack.c.h.b16 %v1192
    %v1298 = vunpack.c.l.b16 %v1193
    %v1299 = vunpack.c.h.b16 %v1193
    %v1300 = vpack.c.b16 %v1240, %v1236
    %v1301 = vpack.c.b16 %v1241, %v1237
    %v1302 = vpack.c.b16 %v1242, %v1238
    %v1303 = vpack.c.b16 %v1243, %v1239
    %v1304 = vpack.c.b16 %v1248, %v1244
    %v1305 = vpack.c.b16 %v1249, %v1245
    %v1306 = vpack.c.b16 %v1250, %v1246
    %v1307 = vpack.c.b16 %v1251, %v1247
    %v1308 = vpack.c.b16 %v1256, %v1252
    %v1309 = vpack.c.b16 %v1257, %v1253
    %v1310 = vpack.c.b16 %v1258, %v1254
    %v1311 = vpack.c.b16 %v1259, %v1255
    %v1312 = vpack.c.b16 %v1264, %v1260
    %v1313 = vpack.c.b16 %v1265, %v1261
    %v1314 = vpack.c.b16 %v1266, %v1262
    %v1315 = vpack.c.b16 %v1267, %v1263
    %v1316 = vpack.c.b16 %v1272, %v1268
    %v1317 = vpack.c.b16 %v1273, %v1269
    %v1318 = vpack.c.b16 %v1274, %v1270
    %v1319 = vpack.c.b16 %v1275, %v1271
    %v1320 = vpack.c.b16 %v1280, %v1276
    %v1321 = vpack.c.b16 %v1281, %v1277
    %v1322 = vpack.c.b16 %v1282, %v1278
    %v1323 = vpack.c.b16 %v1283, %v1279
    %v1324 = vpack.c.b16 %v1288, %v1284
    %v1325 = vpack.c.b16 %v1289, %v1285
    %v1326 = vpack.c.b16 %v1290, %v1286
    %v1327 = vpack.c.b16 %v1291, %v1287
    %v1328 = vpack.c.b16 %v1296, %v1292
    %v1329 = vpack.c.b16 %v1297, %v1293
    %v1330 = vpack.c.b16 %v1298, %v1294
    %v1331 = vpack.c.b16 %v1299, %v1295
    %1364 = vmatpush.bf16.msra.mxu0 %v1328
    %1365 = vmatpush.bf16.msra.mxu0 %v1324
    %1366 = vmatpush.bf16.msra.mxu0 %v1320
    %1367 = vmatpush.bf16.msra.mxu0 %v1316
    %1368 = vmatpush.bf16.msra.mxu0 %v1312
    %1369 = vmatpush.bf16.msra.mxu0 %v1308
    %1370 = vmatpush.bf16.msra.mxu0 %v1304
    %1371 = vmatpush.bf16.msra.mxu0 %v1300
    %1372 = vmatmul.bf16.gmra.mxu0 %v1161
    %v1373 = vpop.f32.mrf.mxu0
    %v1374 = vadd.f32 %v1196, %v1373
    %v1375 = vpop.f32.mrf.mxu0
    %v1376 = vadd.f32 %v1196, %v1375
    %1377 = vdwg.mxu0
    %1378 = vmatpush.bf16.msra.mxu0 %v1329
    %1379 = vmatpush.bf16.msra.mxu0 %v1325
    %1380 = vmatpush.bf16.msra.mxu0 %v1321
    %1381 = vmatpush.bf16.msra.mxu0 %v1317
    %1382 = vmatpush.bf16.msra.mxu0 %v1313
    %1383 = vmatpush.bf16.msra.mxu0 %v1309
    %1384 = vmatpush.bf16.msra.mxu0 %v1305
    %1385 = vmatpush.bf16.msra.mxu0 %v1301
    %1386 = vmatmul.bf16.gmra.mxu0 %v1161
    %v1387 = vpop.f32.mrf.mxu0
    %v1388 = vadd.f32 %v1197, %v1387
    %v1389 = vpop.f32.mrf.mxu0
    %v1390 = vadd.f32 %v1197, %v1389
    %1391 = vdwg.mxu0
    %1392 = vmatpush.bf16.msra.mxu0 %v1330
    %1393 = vmatpush.bf16.msra.mxu0 %v1326
    %1394 = vmatpush.bf16.msra.mxu0 %v1322
    %1395 = vmatpush.bf16.msra.mxu0 %v1318
    %1396 = vmatpush.bf16.msra.mxu0 %v1314
    %1397 = vmatpush.bf16.msra.mxu0 %v1310
    %1398 = vmatpush.bf16.msra.mxu0 %v1306
    %1399 = vmatpush.bf16.msra.mxu0 %v1302
    %1400 = vmatmul.bf16.gmra.mxu0 %v1161
    %v1401 = vpop.f32.mrf.mxu0
    %v1402 = vadd.f32 %v1198, %v1401
    %v1403 = vpop.f32.mrf.mxu0
    %v1404 = vadd.f32 %v1198, %v1403
    %1405 = vdwg.mxu0
    %1406 = vmatpush.bf16.msra.mxu0 %v1331
    %1407 = vmatpush.bf16.msra.mxu0 %v1327
    %1408 = vmatpush.bf16.msra.mxu0 %v1323
    %1409 = vmatpush.bf16.msra.mxu0 %v1319
    %1410 = vmatpush.bf16.msra.mxu0 %v1315
    %1411 = vmatpush.bf16.msra.mxu0 %v1311
    %1412 = vmatpush.bf16.msra.mxu0 %v1307
    %1413 = vmatpush.bf16.msra.mxu0 %v1303
    %1414 = vmatmul.bf16.gmra.mxu0 %v1161
    %v1415 = vpop.f32.mrf.mxu0
    %v1416 = vadd.f32 %v1199, %v1415
    %v1417 = vpop.f32.mrf.mxu0
    %v1418 = vadd.f32 %v1199, %v1417
    %1419 = vdwg.mxu0
    %v1420 = vmul.f32 %v1374, 0.5
    %v1421 = vmul.f32 %v1388, 0.5
    %v1422 = vmul.f32 %v1402, 0.5
    %v1423 = vmul.f32 %v1416, 0.5
    %v1424 = vmul.f32 %v1376, 0.5
    %v1425 = vmul.f32 %v1390, 0.5
    %v1426 = vmul.f32 %v1404, 0.5
    %v1427 = vmul.f32 %v1418, 0.5
    %v1428 = vmul.f32 %v1374, 0.70710677
    %v1429 = vmul.f32 %v1388, 0.70710677
    %v1430 = vmul.f32 %v1402, 0.70710677
    %v1431 = vmul.f32 %v1416, 0.70710677
    %v1432 = vmul.f32 %v1376, 0.70710677
    %v1433 = vmul.f32 %v1390, 0.70710677
    %v1434 = vmul.f32 %v1404, 0.70710677
    %v1435 = vmul.f32 %v1418, 0.70710677
    %vm1436 = vcmp.lt.f32.partialorder %v1428, 0.0
    %vm1437 = vcmp.lt.f32.partialorder %v1429, 0.0
    %vm1438 = vcmp.lt.f32.partialorder %v1430, 0.0
    %vm1439 = vcmp.lt.f32.partialorder %v1431, 0.0
    %vm1440 = vcmp.lt.f32.partialorder %v1432, 0.0
    %vm1441 = vcmp.lt.f32.partialorder %v1433, 0.0
    %vm1442 = vcmp.lt.f32.partialorder %v1434, 0.0
    %vm1443 = vcmp.lt.f32.partialorder %v1435, 0.0
    %v1444 = vsel %vm1436, -1.0, 1.0
    %v1445 = vsel %vm1437, -1.0, 1.0
    %v1446 = vsel %vm1438, -1.0, 1.0
    %v1447 = vsel %vm1439, -1.0, 1.0
    %v1448 = vsel %vm1440, -1.0, 1.0
    %v1449 = vsel %vm1441, -1.0, 1.0
    %v1450 = vsel %vm1442, -1.0, 1.0
    %v1451 = vsel %vm1443, -1.0, 1.0
    %v1452 = vand.u32 2147483647, %v1428
    %v1453 = vand.u32 2147483647, %v1429
    %v1454 = vand.u32 2147483647, %v1430
    %v1455 = vand.u32 2147483647, %v1431
    %v1456 = vand.u32 2147483647, %v1432
    %v1457 = vand.u32 2147483647, %v1433
    %v1458 = vand.u32 2147483647, %v1434
    %v1459 = vand.u32 2147483647, %v1435
    %v1460 = vmul.f32 %v1452, 0.3275911
    %v1461 = vmul.f32 %v1453, 0.3275911
    %v1462 = vmul.f32 %v1454, 0.3275911
    %v1463 = vmul.f32 %v1455, 0.3275911
    %v1464 = vmul.f32 %v1456, 0.3275911
    %v1465 = vmul.f32 %v1457, 0.3275911
    %v1466 = vmul.f32 %v1458, 0.3275911
    %v1467 = vmul.f32 %v1459, 0.3275911
    %v1468 = vadd.f32 %v1460, 1.0
    %v1469 = vadd.f32 %v1461, 1.0
    %v1470 = vadd.f32 %v1462, 1.0
    %v1471 = vadd.f32 %v1463, 1.0
    %v1472 = vadd.f32 %v1464, 1.0
    %v1473 = vadd.f32 %v1465, 1.0
    %v1474 = vadd.f32 %v1466, 1.0
    %v1475 = vadd.f32 %v1467, 1.0
    %v1476 = vrcp.pop %v1468
    %v1477 = vrcp.pop %v1469
    %v1478 = vrcp.pop %v1470
    %v1479 = vrcp.pop %v1471
    %v1480 = vrcp.pop %v1472
    %v1481 = vrcp.pop %v1473
    %v1482 = vrcp.pop %v1474
    %v1483 = vrcp.pop %v1475
    %v1484 = vmul.f32 %v1476, 1.0614054
    %v1485 = vmul.f32 %v1477, 1.0614054
    %v1486 = vmul.f32 %v1478, 1.0614054
    %v1487 = vmul.f32 %v1479, 1.0614054
    %v1488 = vmul.f32 %v1480, 1.0614054
    %v1489 = vmul.f32 %v1481, 1.0614054
    %v1490 = vmul.f32 %v1482, 1.0614054
    %v1491 = vmul.f32 %v1483, 1.0614054
    %v1492 = vadd.f32 %v1484, -1.4531521
    %v1493 = vadd.f32 %v1485, -1.4531521
    %v1494 = vadd.f32 %v1486, -1.4531521
    %v1495 = vadd.f32 %v1487, -1.4531521
    %v1496 = vadd.f32 %v1488, -1.4531521
    %v1497 = vadd.f32 %v1489, -1.4531521
    %v1498 = vadd.f32 %v1490, -1.4531521
    %v1499 = vadd.f32 %v1491, -1.4531521
    %v1500 = vmul.f32 %v1476, %v1492
    %v1501 = vmul.f32 %v1477, %v1493
    %v1502 = vmul.f32 %v1478, %v1494
    %v1503 = vmul.f32 %v1479, %v1495
    %v1504 = vmul.f32 %v1480, %v1496
    %v1505 = vmul.f32 %v1481, %v1497
    %v1506 = vmul.f32 %v1482, %v1498
    %v1507 = vmul.f32 %v1483, %v1499
    %v1508 = vadd.f32 %v1500, 1.4214138
    %v1509 = vadd.f32 %v1501, 1.4214138
    %v1510 = vadd.f32 %v1502, 1.4214138
    %v1511 = vadd.f32 %v1503, 1.4214138
    %v1512 = vadd.f32 %v1504, 1.4214138
    %v1513 = vadd.f32 %v1505, 1.4214138
    %v1514 = vadd.f32 %v1506, 1.4214138
    %v1515 = vadd.f32 %v1507, 1.4214138
    %v1516 = vmul.f32 %v1476, %v1508
    %v1517 = vmul.f32 %v1477, %v1509
    %v1518 = vmul.f32 %v1478, %v1510
    %v1519 = vmul.f32 %v1479, %v1511
    %v1520 = vmul.f32 %v1480, %v1512
    %v1521 = vmul.f32 %v1481, %v1513
    %v1522 = vmul.f32 %v1482, %v1514
    %v1523 = vmul.f32 %v1483, %v1515
    %v1524 = vadd.f32 %v1516, -0.28449672
    %v1525 = vadd.f32 %v1517, -0.28449672
    %v1526 = vadd.f32 %v1518, -0.28449672
    %v1527 = vadd.f32 %v1519, -0.28449672
    %v1528 = vadd.f32 %v1520, -0.28449672
    %v1529 = vadd.f32 %v1521, -0.28449672
    %v1530 = vadd.f32 %v1522, -0.28449672
    %v1531 = vadd.f32 %v1523, -0.28449672
    %v1532 = vmul.f32 %v1476, %v1524
    %v1533 = vmul.f32 %v1477, %v1525
    %v1534 = vmul.f32 %v1478, %v1526
    %v1535 = vmul.f32 %v1479, %v1527
    %v1536 = vmul.f32 %v1480, %v1528
    %v1537 = vmul.f32 %v1481, %v1529
    %v1538 = vmul.f32 %v1482, %v1530
    %v1539 = vmul.f32 %v1483, %v1531
    %v1540 = vadd.f32 %v1532, 0.2548296
    %v1541 = vadd.f32 %v1533, 0.2548296
    %v1542 = vadd.f32 %v1534, 0.2548296
    %v1543 = vadd.f32 %v1535, 0.2548296
    %v1544 = vadd.f32 %v1536, 0.2548296
    %v1545 = vadd.f32 %v1537, 0.2548296
    %v1546 = vadd.f32 %v1538, 0.2548296
    %v1547 = vadd.f32 %v1539, 0.2548296
    %v1548 = vmul.f32 %v1476, %v1540
    %v1549 = vmul.f32 %v1477, %v1541
    %v1550 = vmul.f32 %v1478, %v1542
    %v1551 = vmul.f32 %v1479, %v1543
    %v1552 = vmul.f32 %v1480, %v1544
    %v1553 = vmul.f32 %v1481, %v1545
    %v1554 = vmul.f32 %v1482, %v1546
    %v1555 = vmul.f32 %v1483, %v1547
    %v1556 = vsub.f32 0.0, %v1452
    %v1557 = vsub.f32 0.0, %v1453
    %v1558 = vsub.f32 0.0, %v1454
    %v1559 = vsub.f32 0.0, %v1455
    %v1560 = vsub.f32 0.0, %v1456
    %v1561 = vsub.f32 0.0, %v1457
    %v1562 = vsub.f32 0.0, %v1458
    %v1563 = vsub.f32 0.0, %v1459
    %v1564 = vmul.f32 %v1556, %v1452
    %v1565 = vmul.f32 %v1557, %v1453
    %v1566 = vmul.f32 %v1558, %v1454
    %v1567 = vmul.f32 %v1559, %v1455
    %v1568 = vmul.f32 %v1560, %v1456
    %v1569 = vmul.f32 %v1561, %v1457
    %v1570 = vmul.f32 %v1562, %v1458
    %v1571 = vmul.f32 %v1563, %v1459
    %v1572 = vmul.f32 %v1564, 1.442695
    %v1573 = vpow.pop %v1572
    %v1574 = vmul.f32 %v1565, 1.442695
    %v1575 = vpow.pop %v1574
    %v1576 = vmul.f32 %v1566, 1.442695
    %v1577 = vpow.pop %v1576
    %v1578 = vmul.f32 %v1567, 1.442695
    %v1579 = vpow.pop %v1578
    %v1580 = vmul.f32 %v1568, 1.442695
    %v1581 = vpow.pop %v1580
    %v1582 = vmul.f32 %v1569, 1.442695
    %v1583 = vpow.pop %v1582
    %v1584 = vmul.f32 %v1570, 1.442695
    %v1585 = vpow.pop %v1584
    %v1586 = vmul.f32 %v1571, 1.442695
    %v1587 = vpow.pop %v1586
    %v1588 = vmul.f32 %v1548, %v1573
    %v1589 = vmul.f32 %v1549, %v1575
    %v1590 = vmul.f32 %v1550, %v1577
    %v1591 = vmul.f32 %v1551, %v1579
    %v1592 = vmul.f32 %v1552, %v1581
    %v1593 = vmul.f32 %v1553, %v1583
    %v1594 = vmul.f32 %v1554, %v1585
    %v1595 = vmul.f32 %v1555, %v1587
    %v1596 = vsub.f32 1.0, %v1588
    %v1597 = vsub.f32 1.0, %v1589
    %v1598 = vsub.f32 1.0, %v1590
    %v1599 = vsub.f32 1.0, %v1591
    %v1600 = vsub.f32 1.0, %v1592
    %v1601 = vsub.f32 1.0, %v1593
    %v1602 = vsub.f32 1.0, %v1594
    %v1603 = vsub.f32 1.0, %v1595
    %v1604 = vmul.f32 %v1444, %v1596
    %v1605 = vmul.f32 %v1445, %v1597
    %v1606 = vmul.f32 %v1446, %v1598
    %v1607 = vmul.f32 %v1447, %v1599
    %v1608 = vmul.f32 %v1448, %v1600
    %v1609 = vmul.f32 %v1449, %v1601
    %v1610 = vmul.f32 %v1450, %v1602
    %v1611 = vmul.f32 %v1451, %v1603
    %v1612 = vadd.f32 %v1604, 1.0
    %v1613 = vadd.f32 %v1605, 1.0
    %v1614 = vadd.f32 %v1606, 1.0
    %v1615 = vadd.f32 %v1607, 1.0
    %v1616 = vadd.f32 %v1608, 1.0
    %v1617 = vadd.f32 %v1609, 1.0
    %v1618 = vadd.f32 %v1610, 1.0
    %v1619 = vadd.f32 %v1611, 1.0
    %v1620 = vmul.f32 %v1420, %v1612
    %v1621 = vmul.f32 %v1421, %v1613
    %v1622 = vmul.f32 %v1422, %v1614
    %v1623 = vmul.f32 %v1423, %v1615
    %v1624 = vmul.f32 %v1424, %v1616
    %v1625 = vmul.f32 %v1425, %v1617
    %v1626 = vmul.f32 %v1426, %v1618
    %v1627 = vmul.f32 %v1427, %v1619
    %v1628 = vpack.c.bf16 %v1624, %v1620
    %v1629 = vpack.c.bf16 %v1625, %v1621
    %v1630 = vpack.c.bf16 %v1626, %v1622
    %v1631 = vpack.c.bf16 %v1627, %v1623
    %v1632 = vld [vmem:[#allocation17] sm:$0xf]
    %v1633 = vld [vmem:[#allocation17 + $0x4] sm:$0xf]
    %v1634 = vld [vmem:[#allocation17 + $0x8] sm:$0xf]
    %v1635 = vld [vmem:[#allocation17 + $0xc] sm:$0xf]
    %v1636 = vld [vmem:[#allocation17 + $0x10] sm:$0xf]
    %v1637 = vld [vmem:[#allocation17 + $0x14] sm:$0xf]
    %v1638 = vld [vmem:[#allocation17 + $0x18] sm:$0xf]
    %v1639 = vld [vmem:[#allocation17 + $0x1c] sm:$0xf]
    %v1640 = vld [vmem:[#allocation17 + $0x20] sm:$0xf]
    %v1641 = vld [vmem:[#allocation17 + $0x24] sm:$0xf]
    %v1642 = vld [vmem:[#allocation17 + $0x28] sm:$0xf]
    %v1643 = vld [vmem:[#allocation17 + $0x2c] sm:$0xf]
    %v1644 = vld [vmem:[#allocation17 + $0x30] sm:$0xf]
    %v1645 = vld [vmem:[#allocation17 + $0x34] sm:$0xf]
    %v1646 = vld [vmem:[#allocation17 + $0x38] sm:$0xf]
    %v1647 = vld [vmem:[#allocation17 + $0x3c] sm:$0xf]
    %v1648 = vld [vmem:[#allocation17 + $0x40] sm:$0xf]
    %v1649 = vld [vmem:[#allocation17 + $0x44] sm:$0xf]
    %v1650 = vld [vmem:[#allocation17 + $0x48] sm:$0xf]
    %v1651 = vld [vmem:[#allocation17 + $0x4c] sm:$0xf]
    %v1652 = vld [vmem:[#allocation17 + $0x50] sm:$0xf]
    %v1653 = vld [vmem:[#allocation17 + $0x54] sm:$0xf]
    %v1654 = vld [vmem:[#allocation17 + $0x58] sm:$0xf]
    %v1655 = vld [vmem:[#allocation17 + $0x5c] sm:$0xf]
    %v1656 = vld [vmem:[#allocation17 + $0x60] sm:$0xf]
    %v1657 = vld [vmem:[#allocation17 + $0x64] sm:$0xf]
    %v1658 = vld [vmem:[#allocation17 + $0x68] sm:$0xf]
    %v1659 = vld [vmem:[#allocation17 + $0x6c] sm:$0xf]
    %v1660 = vld [vmem:[#allocation17 + $0x70] sm:$0xf]
    %v1661 = vld [vmem:[#allocation17 + $0x74] sm:$0xf]
    %v1662 = vld [vmem:[#allocation17 + $0x78] sm:$0xf]
    %v1663 = vld [vmem:[#allocation17 + $0x7c] sm:$0xf]
    %v1664 = vld [vmem:[#allocation17 + $0x80] sm:$0xf]
    %v1665 = vld [vmem:[#allocation17 + $0x84] sm:$0xf]
    %v1666 = vld [vmem:[#allocation17 + $0x88] sm:$0xf]
    %v1667 = vld [vmem:[#allocation17 + $0x8c] sm:$0xf]
    %v1668 = vld [vmem:[#allocation17 + $0x90] sm:$0xf]
    %v1669 = vld [vmem:[#allocation17 + $0x94] sm:$0xf]
    %v1670 = vld [vmem:[#allocation17 + $0x98] sm:$0xf]
    %v1671 = vld [vmem:[#allocation17 + $0x9c] sm:$0xf]
    %v1672 = vld [vmem:[#allocation17 + $0xa0] sm:$0xf]
    %v1673 = vld [vmem:[#allocation17 + $0xa4] sm:$0xf]
    %v1674 = vld [vmem:[#allocation17 + $0xa8] sm:$0xf]
    %v1675 = vld [vmem:[#allocation17 + $0xac] sm:$0xf]
    %v1676 = vld [vmem:[#allocation17 + $0xb0] sm:$0xf]
    %v1677 = vld [vmem:[#allocation17 + $0xb4] sm:$0xf]
    %v1678 = vld [vmem:[#allocation17 + $0xb8] sm:$0xf]
    %v1679 = vld [vmem:[#allocation17 + $0xbc] sm:$0xf]
    %v1680 = vld [vmem:[#allocation17 + $0xc0] sm:$0xf]
    %v1681 = vld [vmem:[#allocation17 + $0xc4] sm:$0xf]
    %v1682 = vld [vmem:[#allocation17 + $0xc8] sm:$0xf]
    %v1683 = vld [vmem:[#allocation17 + $0xcc] sm:$0xf]
    %v1684 = vld [vmem:[#allocation17 + $0xd0] sm:$0xf]
    %v1685 = vld [vmem:[#allocation17 + $0xd4] sm:$0xf]
    %v1686 = vld [vmem:[#allocation17 + $0xd8] sm:$0xf]
    %v1687 = vld [vmem:[#allocation17 + $0xdc] sm:$0xf]
    %v1688 = vld [vmem:[#allocation17 + $0xe0] sm:$0xf]
    %v1689 = vld [vmem:[#allocation17 + $0xe4] sm:$0xf]
    %v1690 = vld [vmem:[#allocation17 + $0xe8] sm:$0xf]
    %v1691 = vld [vmem:[#allocation17 + $0xec] sm:$0xf]
    %v1692 = vld [vmem:[#allocation17 + $0xf0] sm:$0xf]
    %v1693 = vld [vmem:[#allocation17 + $0xf4] sm:$0xf]
    %v1694 = vld [vmem:[#allocation17 + $0xf8] sm:$0xf]
    %v1695 = vld [vmem:[#allocation17 + $0xfc] sm:$0xf]
    %v1696 = vld [vmem:[%s16] sm:$0x1]
    %v1698 = vperm.slane %v1696, 0
    %v1764 = vunpack.c.l.b16 %v1632
    %v1765 = vunpack.c.l.b16 %v1633
    %v1766 = vunpack.c.l.b16 %v1634
    %v1767 = vunpack.c.l.b16 %v1635
    %v1768 = vunpack.c.l.b16 %v1636
    %v1769 = vunpack.c.l.b16 %v1637
    %v1770 = vunpack.c.l.b16 %v1638
    %v1771 = vunpack.c.l.b16 %v1639
    %v1772 = vunpack.c.l.b16 %v1640
    %v1773 = vunpack.c.l.b16 %v1641
    %v1774 = vunpack.c.l.b16 %v1642
    %v1775 = vunpack.c.l.b16 %v1643
    %v1776 = vunpack.c.l.b16 %v1644
    %v1777 = vunpack.c.l.b16 %v1645
    %v1778 = vunpack.c.l.b16 %v1646
    %v1779 = vunpack.c.l.b16 %v1647
    %v1780 = vunpack.c.l.b16 %v1648
    %v1781 = vunpack.c.l.b16 %v1649
    %v1782 = vunpack.c.l.b16 %v1650
    %v1783 = vunpack.c.l.b16 %v1651
    %v1784 = vunpack.c.l.b16 %v1652
    %v1785 = vunpack.c.l.b16 %v1653
    %v1786 = vunpack.c.l.b16 %v1654
    %v1787 = vunpack.c.l.b16 %v1655
    %v1788 = vunpack.c.l.b16 %v1656
    %v1789 = vunpack.c.l.b16 %v1657
    %v1790 = vunpack.c.l.b16 %v1658
    %v1791 = vunpack.c.l.b16 %v1659
    %v1792 = vunpack.c.l.b16 %v1660
    %v1793 = vunpack.c.l.b16 %v1661
    %v1794 = vunpack.c.l.b16 %v1662
    %v1795 = vunpack.c.l.b16 %v1663
    %v1796 = vunpack.c.l.b16 %v1664
    %v1797 = vunpack.c.l.b16 %v1665
    %v1798 = vunpack.c.l.b16 %v1666
    %v1799 = vunpack.c.l.b16 %v1667
    %v1800 = vunpack.c.l.b16 %v1668
    %v1801 = vunpack.c.l.b16 %v1669
    %v1802 = vunpack.c.l.b16 %v1670
    %v1803 = vunpack.c.l.b16 %v1671
    %v1804 = vunpack.c.l.b16 %v1672
    %v1805 = vunpack.c.l.b16 %v1673
    %v1806 = vunpack.c.l.b16 %v1674
    %v1807 = vunpack.c.l.b16 %v1675
    %v1808 = vunpack.c.l.b16 %v1676
    %v1809 = vunpack.c.l.b16 %v1677
    %v1810 = vunpack.c.l.b16 %v1678
    %v1811 = vunpack.c.l.b16 %v1679
    %v1812 = vunpack.c.l.b16 %v1680
    %v1813 = vunpack.c.l.b16 %v1681
    %v1814 = vunpack.c.l.b16 %v1682
    %v1815 = vunpack.c.l.b16 %v1683
    %v1816 = vunpack.c.l.b16 %v1684
    %v1817 = vunpack.c.l.b16 %v1685
    %v1818 = vunpack.c.l.b16 %v1686
    %v1819 = vunpack.c.l.b16 %v1687
    %v1820 = vunpack.c.l.b16 %v1688
    %v1821 = vunpack.c.l.b16 %v1689
    %v1822 = vunpack.c.l.b16 %v1690
    %v1823 = vunpack.c.l.b16 %v1691
    %v1824 = vunpack.c.l.b16 %v1692
    %v1825 = vunpack.c.l.b16 %v1693
    %v1826 = vunpack.c.l.b16 %v1694
    %v1827 = vunpack.c.l.b16 %v1695
    %v1828 = vpack.c.b16 %v1765, %v1764
    %v1829 = vpack.c.b16 %v1767, %v1766
    %v1830 = vpack.c.b16 %v1769, %v1768
    %v1831 = vpack.c.b16 %v1771, %v1770
    %v1832 = vpack.c.b16 %v1773, %v1772
    %v1833 = vpack.c.b16 %v1775, %v1774
    %v1834 = vpack.c.b16 %v1777, %v1776
    %v1835 = vpack.c.b16 %v1779, %v1778
    %v1836 = vpack.c.b16 %v1781, %v1780
    %v1837 = vpack.c.b16 %v1783, %v1782
    %v1838 = vpack.c.b16 %v1785, %v1784
    %v1839 = vpack.c.b16 %v1787, %v1786
    %v1840 = vpack.c.b16 %v1789, %v1788
    %v1841 = vpack.c.b16 %v1791, %v1790
    %v1842 = vpack.c.b16 %v1793, %v1792
    %v1843 = vpack.c.b16 %v1795, %v1794
    %v1844 = vpack.c.b16 %v1797, %v1796
    %v1845 = vpack.c.b16 %v1799, %v1798
    %v1846 = vpack.c.b16 %v1801, %v1800
    %v1847 = vpack.c.b16 %v1803, %v1802
    %v1848 = vpack.c.b16 %v1805, %v1804
    %v1849 = vpack.c.b16 %v1807, %v1806
    %v1850 = vpack.c.b16 %v1809, %v1808
    %v1851 = vpack.c.b16 %v1811, %v1810
    %v1852 = vpack.c.b16 %v1813, %v1812
    %v1853 = vpack.c.b16 %v1815, %v1814
    %v1854 = vpack.c.b16 %v1817, %v1816
    %v1855 = vpack.c.b16 %v1819, %v1818
    %v1856 = vpack.c.b16 %v1821, %v1820
    %v1857 = vpack.c.b16 %v1823, %v1822
    %v1858 = vpack.c.b16 %v1825, %v1824
    %v1859 = vpack.c.b16 %v1827, %v1826
    %1892 = vmatpush.bf16.msra.mxu0 %v1835
    %1893 = vmatpush.bf16.msra.mxu0 %v1834
    %1894 = vmatpush.bf16.msra.mxu0 %v1833
    %1895 = vmatpush.bf16.msra.mxu0 %v1832
    %1896 = vmatpush.bf16.msra.mxu0 %v1831
    %1897 = vmatpush.bf16.msra.mxu0 %v1830
    %1898 = vmatpush.bf16.msra.mxu0 %v1829
    %1899 = vmatpush.bf16.msra.mxu0 %v1828
    %1900 = vmatmul.bf16.gmra.mxu0 %v1628
    %v1901 = vpop.f32.mrf.mxu0
    %v1902 = vadd.f32 %v1698, %v1901
    %v1903 = vpop.f32.mrf.mxu0
    %v1904 = vadd.f32 %v1698, %v1903
    %1905 = vdwg.mxu0
    %1906 = vmatpush.bf16.msra.mxu0 %v1843
    %1907 = vmatpush.bf16.msra.mxu0 %v1842
    %1908 = vmatpush.bf16.msra.mxu0 %v1841
    %1909 = vmatpush.bf16.msra.mxu0 %v1840
    %1910 = vmatpush.bf16.msra.mxu0 %v1839
    %1911 = vmatpush.bf16.msra.mxu0 %v1838
    %1912 = vmatpush.bf16.msra.mxu0 %v1837
    %1913 = vmatpush.bf16.msra.mxu0 %v1836
    %1914 = vmatmul.bf16.gmra.mxu0 %v1629
    %v1915 = vpop.f32.mrf.mxu0
    %v1916 = vadd.f32 %v1902, %v1915
    %v1917 = vpop.f32.mrf.mxu0
    %v1918 = vadd.f32 %v1904, %v1917
    %1919 = vdwg.mxu0
    %1920 = vmatpush.bf16.msra.mxu0 %v1851
    %1921 = vmatpush.bf16.msra.mxu0 %v1850
    %1922 = vmatpush.bf16.msra.mxu0 %v1849
    %1923 = vmatpush.bf16.msra.mxu0 %v1848
    %1924 = vmatpush.bf16.msra.mxu0 %v1847
    %1925 = vmatpush.bf16.msra.mxu0 %v1846
    %1926 = vmatpush.bf16.msra.mxu0 %v1845
    %1927 = vmatpush.bf16.msra.mxu0 %v1844
    %1928 = vmatmul.bf16.gmra.mxu0 %v1630
    %v1929 = vpop.f32.mrf.mxu0
    %v1930 = vadd.f32 %v1916, %v1929
    %v1931 = vpop.f32.mrf.mxu0
    %v1932 = vadd.f32 %v1918, %v1931
    %1933 = vdwg.mxu0
    %1934 = vmatpush.bf16.msra.mxu0 %v1859
    %1935 = vmatpush.bf16.msra.mxu0 %v1858
    %1936 = vmatpush.bf16.msra.mxu0 %v1857
    %1937 = vmatpush.bf16.msra.mxu0 %v1856
    %1938 = vmatpush.bf16.msra.mxu0 %v1855
    %1939 = vmatpush.bf16.msra.mxu0 %v1854
    %1940 = vmatpush.bf16.msra.mxu0 %v1853
    %1941 = vmatpush.bf16.msra.mxu0 %v1852
    %1942 = vmatmul.bf16.gmra.mxu0 %v1631
    %v1943 = vpop.f32.mrf.mxu0
    %v1944 = vadd.f32 %v1930, %v1943
    %v1945 = vpop.f32.mrf.mxu0
    %v1946 = vadd.f32 %v1932, %v1945
    %1947 = vdwg.mxu0
    %v1948 = vadd.f32 %v1107, %v1944
    %v1949 = vadd.f32 %v1108, %v1946
    %1950 = vst [vmem:[#allocation18] sm:$0xff] %v1948
    %1951 = vst [vmem:[#allocation18 + $0x8] sm:$0xff] %v1949
    // Predicated region
    $region106: #{tpu_custom_call.1} parent=1 // pred_check
      _
    $region107: #{tpu_custom_call.1} parent=1 // pred_check_branch
      %1953 = sbr.rel (0) target = $region109
    $region108: #{tpu_custom_call.1} parent=1 // pred_region
      %1955 = vsyncadd [#allocation5], 0
      %s1956 = sshll.u32 [#allocation18], 4
      %s1957 = int_to_ptr.vmem [resolvable:$true] %s1956
      %s1958 = sshll.u32 %s17, 4
      %s1959 = int_to_ptr.hbm [resolvable:$true] %s1958
      %1964 = dma.vmem_to_hbm [thread:$0]  %s1957, 256, %s1959, [#allocation5], 128, 128, 8
    $region109: #{tpu_custom_call.1} parent=1 // pred_fallthru
      _
    // Predicated region
    $region110: #{tpu_custom_call.1} parent=1 // pred_check
      _
    $region111: #{tpu_custom_call.1} parent=1 // pred_check_branch
      %1966 = sbr.rel (0) target = $region113
    $region112: #{tpu_custom_call.1} parent=1 // pred_region
      %1968 = dma.done [#allocation5], 256
    $region113: #{tpu_custom_call.1} parent=1 // pred_fallthru
      _
    %1969 = vsyncpa [#allocation4], 1
    %1970 = vsyncpa [#allocation7], 1
    %1971 = vsyncpa [#allocation10], 1
    %1972 = vsyncpa [#allocation13], 1
    %1973 = vsyncpa [#allocation16], 1
    %1974 = vsyncpa [#allocation5], 1

</llo_original>
